<compile_context>
chip_gen: v7x
topology: tpu7x:2x2x1
jax: 0.10.0
libtpu: 0.0.40
codegen_flags: <defaults>
</compile_context>

<pallas_src>
import functools

import numpy as np
import jax
import jax.numpy as jnp
from jax.experimental import pallas as pl
from jax.experimental.pallas import tpu as pltpu

K = 3  # conv kernel width of the synthetic separator (Conv1d(1, n_src, 3, padding=1))


def _sep_conv_kernel(x_ref, w_ref, b_ref, o_ref, *, n_src, C, Bblk, Tp, t_tile, sub):
    """One (batch-group, time-tile) grid step.

    x_ref: (1, Bblk*C, Tp)   full (padded) time axis; VMEM-resident across the
                             t grid axis (index_map ignores ti), single-buffered.
    w_ref: (n_src, K)  SMEM  separator conv weights (in_channels == 1)
    b_ref: (n_src,)    SMEM  separator conv bias
    o_ref: (1, Bblk, n_src*C, t_tile)   lane-dense output tile
    """
    t = pl.program_id(1)
    nt = pl.num_programs(1)
    n_sub = t_tile // sub

    # Static unroll over sub-chunks bounds the live whole-width temporaries to
    # ~4 x (8, sub) values (sub <= 512 -> well inside the 64-vreg file).
    for j in range(n_sub):
        start = pl.multiple_of(t * t_tile + j * sub, 128)
        xc = x_ref[0, :, pl.ds(start, sub)]              # (R, sub)
        # Neighbour shifts (XLU rolls). Columns 0 / sub-1 are wrong and are fixed
        # by 1-column corrective stores below instead of full-tile selects.
        xl = pltpu.roll(xc, 1, 1)                        # x[start+k-1] for k >= 1
        xr = pltpu.roll(xc, sub - 1, 1)                  # x[start+k+1] for k <= sub-2

        # 1-sample halo columns from 128-aligned neighbour groups of the resident
        # block (one vreg load + static lane extract each; avoids unaligned dynamic
        # 1-lane slices for Mosaic-lowering safety).
        ls = pl.multiple_of(jnp.maximum(start - 128, 0), 128)
        rs = pl.multiple_of(jnp.minimum(start + sub, Tp - 128), 128)
        lcol = x_ref[0, :, pl.ds(ls, 128)][:, 127:128]   # x[start-1]    (R, 1)
        rcol = x_ref[0, :, pl.ds(rs, 128)][:, 0:1]       # x[start+sub]  (R, 1)
        if j == 0:                                       # global left edge: 'same' zero pad
            lcol = jnp.where(t == 0, 0.0, lcol)
        if j == n_sub - 1:                               # global right edge
            rcol = jnp.where(t == nt - 1, 0.0, rcol)

        x0, x1 = xc[:, 0:1], xc[:, 1:2]
        xm2, xm1 = xc[:, sub - 2:sub - 1], xc[:, sub - 1:sub]

        for s in range(n_src):                           # static unroll; n_src tiny
            w0, w1, w2 = w_ref[s, 0], w_ref[s, 1], w_ref[s, 2]
            bs = b_ref[s]
            # conv 'same': out[k] = w0*x[k-1] + w1*x[k] + w2*x[k+1] + b
            y = (w0 * xl + w1 * xc + w2 * xr) + bs                 # (R, sub)
            y_first = (w0 * lcol + w1 * x0 + w2 * x1) + bs         # (R, 1) corrected col 0
            y_last = (w0 * xm2 + w1 * xm1 + w2 * rcol) + bs        # (R, 1) corrected col sub-1
            for p in range(Bblk):                        # scatter batch slots back out
                rows = slice(p * C, (p + 1) * C)
                dst = slice(s * C, (s + 1) * C)
                o_ref[0, p, dst, j * sub:(j + 1) * sub] = y[rows].astype(o_ref.dtype)
                o_ref[0, p, dst, j * sub:j * sub + 1] = y_first[rows].astype(o_ref.dtype)
                o_ref[0, p, dst, (j + 1) * sub - 1:(j + 1) * sub] = y_last[rows].astype(o_ref.dtype)


def _round_up(a, m):
    return -(-a // m) * m


def _pick_tiles(T, cap=4096):
    """Largest DMA tile (<= cap) covering T, plus a compute sub-chunk width."""
    t_tile = min(cap, _round_up(T, 128))
    sub = next(s for s in (512, 256, 128) if t_tile % s == 0)
    return t_tile, sub


def multichannel_sep_forward(x, w, b, *, sample_rate=8000, sample_rate_separator=8000,
                             t_tile=None, sub=None, out_dtype=jnp.float32):
    """Pallas equivalent of MultiChannel_Sep._slow_forward.

    x: (B, C, T) float32, w: (n_src, K), b: (n_src,)  ->  (B, n_src, C, T) out_dtype.
    (out_dtype=jnp.bfloat16 halves the dominant HBM write traffic if the consumer
     tolerates it; compute stays f32.)
    """
    B, C, T = x.shape
    n_src = w.shape[0]

    # With equal sample rates both F.interpolate calls are identity.
    assert sample_rate == sample_rate_separator
    # TODO(synk): implement linear resampling for sample_rate != sample_rate_separator.

    x = x.astype(jnp.float32)
    w = w.astype(jnp.float32)
    b = b.astype(jnp.float32)

    # --- tiling --------------------------------------------------------------
    if t_tile is None:
        t_tile, auto_sub = _pick_tiles(T)
        if sub is None:
            sub = auto_sub
    if sub is None:
        sub = next(s for s in (512, 256, 128) if t_tile % s == 0)
    assert t_tile % sub == 0 and sub % 128 == 0

    Tp = _round_up(T, t_tile)
    if Tp != T:
        # Zero-padding reproduces the conv's 'same' zero pad at the true right edge
        # exactly; padded columns are sliced off below.
        # TODO(synk): mask the final tile in-kernel instead, to avoid this pad copy
        # (and the output slice copy) for ragged T.
        x = jnp.pad(x, ((0, 0), (0, 0), (0, Tp - T)))
    num_t = Tp // t_tile

    # --- fold batch into the sublane dim when C < 8 (free row-major reshape) --
    Bblk = 1
    if C < 8:
        for cand in range(min(B, 8 // C), 0, -1):
            if B % cand == 0:
                Bblk = cand
                break
    Bg = B // Bblk
    R = Bblk * C
    xf = x.reshape(Bg, R, Tp)

    # --- VMEM budget (v7x: 64 MiB physical / 32 MiB scoped default) -----------
    in_bytes = R * Tp * 4                                     # single-buffered resident input
    out_bytes = 2 * Bblk * n_src * C * t_tile * np.dtype(out_dtype).itemsize
    vmem_need = in_bytes + out_bytes
    vmem_limit = None
    if vmem_need > 24 << 20:
        # TODO(synk): for very long T on v7x, tile the input over t with a halo
        # instead of keeping the full time axis resident.
        vmem_limit = min(int(vmem_need * 1.25) + (2 << 20), 100 << 20)

    # --- megacore sharding -----------------------------------------------------
    # Shard over batch groups only: with the t axis "parallel" both v7x cores
    # would re-DMA the same full-T input block (its index_map ignores ti).
    # TODO(synk): for Bg == 1, shard T across cores with per-core halo tiles.
    dims = ("parallel", "arbitrary") if Bg > 1 else ("arbitrary", "arbitrary")

    kernel = functools.partial(_sep_conv_kernel, n_src=n_src, C=C, Bblk=Bblk,
                               Tp=Tp, t_tile=t_tile, sub=sub)

    def build(single_buffer_input):
        if single_buffer_input:
            # The resident input block only changes along the batch-group axis, so
            # double-buffering it across the t loop buys nothing: single-buffer it.
            x_spec = pl.BlockSpec((1, R, Tp), lambda bi, ti: (bi, 0, 0),
                                  pipeline_mode=pl.Buffered(buffer_count=1))
        else:
            x_spec = pl.BlockSpec((1, R, Tp), lambda bi, ti: (bi, 0, 0))
        params = {"dimension_semantics": dims}
        if vmem_limit is not None:
            params["vmem_limit_bytes"] = vmem_limit
        return pl.pallas_call(
            kernel,
            out_shape=jax.ShapeDtypeStruct((Bg, Bblk, n_src * C, Tp), out_dtype),
            grid_spec=pltpu.PrefetchScalarGridSpec(
                num_scalar_prefetch=0,
                grid=(Bg, num_t),
                in_specs=[
                    x_spec,
                    pl.BlockSpec(memory_space=pltpu.MemorySpace.SMEM),  # w (n_src, K)
                    pl.BlockSpec(memory_space=pltpu.MemorySpace.SMEM),  # b (n_src,)
                ],
                out_specs=pl.BlockSpec((1, Bblk, n_src * C, t_tile),
                                       lambda bi, ti: (bi, 0, 0, ti)),
            ),
            compiler_params=pltpu.CompilerParams(**params),
        )

    try:
        out = build(True)(xf, w, b)
    except Exception:  # pl.Buffered(1) unsupported on this jax version -> double-buffer
        out = build(False)(xf, w, b)

    out = out.reshape(B, n_src * C, Tp)          # free row-major reshape
    if Tp != T:
        out = out[:, :, :T]
    return out.reshape(B, n_src, C, T)           # free row-major reshape


def _reference(x, w, b):
    """Pure-JAX reference of the same forward (per-channel 1D 'same' conv separator)."""
    B, C, T = x.shape
    n_src = w.shape[0]
    pad = K // 2
    xp = jnp.pad(x, ((0, 0), (0, 0), (pad, pad)))     # (B, C, T + 2)
    out = jnp.zeros((B, n_src, C, T), jnp.float32)
    for k in range(K):
        out = out + w[None, :, None, None, k] * xp[:, None, :, k:k + T]
    return out + b[None, :, None, None]


if __name__ == "__main__":
    B, n_channel, T = 2, 4, 512
    n_src = 3

    key = jax.random.PRNGKey(0)
    kx, kw, kb = jax.random.split(key, 3)
    x = jax.random.normal(kx, (B, n_channel, T), dtype=jnp.float32)

    # Deterministic synthetic separator parameters (Conv1d(1, n_src, 3, pad=1)).
    w = jax.random.normal(kw, (n_src, K), dtype=jnp.float32) * 0.5
    b = jax.random.normal(kb, (n_src,), dtype=jnp.float32) * 0.1

    ref = _reference(x, w, b)

    # 1) default tiling (single tile / single sub-chunk at this toy length)
    out = jax.block_until_ready(multichannel_sep_forward(x, w, b))
    assert out.shape == (B, n_src, n_channel, T), out.shape
    assert jnp.allclose(out, ref, atol=1e-5, rtol=1e-5), "mismatch (default tiling)"

    # 2) small tiles: exercises the cross-tile halo path (grid = (1, 4))
    out2 = jax.block_until_ready(multichannel_sep_forward(x, w, b, t_tile=128))
    assert jnp.allclose(out2, ref, atol=1e-5, rtol=1e-5), "mismatch (t_tile=128)"

    # 3) multi-sub-chunk tiles: exercises the intra-tile sub-chunk halo path
    out3 = jax.block_until_ready(multichannel_sep_forward(x, w, b, t_tile=256, sub=128))
    assert jnp.allclose(out3, ref, atol=1e-5, rtol=1e-5), "mismatch (t_tile=256, sub=128)"

    # 4) ragged T (not a multiple of 128): exercises the zero-pad / slice path
    T2 = 400
    x2 = jax.random.normal(jax.random.PRNGKey(1), (B, n_channel, T2), dtype=jnp.float32)
    ref2 = _reference(x2, w, b)
    out4 = jax.block_until_ready(multichannel_sep_forward(x2, w, b))
    assert out4.shape == (B, n_src, n_channel, T2), out4.shape
    assert jnp.allclose(out4, ref2, atol=1e-5, rtol=1e-5), "mismatch (ragged T)"

    # 5) C that does not divide 8 (partial sublane fold, R = 6, n_src*C = 9)
    x3 = jax.random.normal(jax.random.PRNGKey(2), (2, 3, 384), dtype=jnp.float32)
    ref3 = _reference(x3, w, b)
    out5 = jax.block_until_ready(multichannel_sep_forward(x3, w, b))
    assert jnp.allclose(out5, ref3, atol=1e-5, rtol=1e-5), "mismatch (C=3)"

    print("KERNEL_OK")
</pallas_src>

<mosaic_0001>
module attributes {stable_mosaic.version = 11 : i64} {
  func.func @_sep_conv_kernel(%arg0: i32, %arg1: i32, %arg2: memref<1x8x512xf32, #tpu.memory_space<vmem>>, %arg3: memref<3x3xf32, #tpu.memory_space<smem>>, %arg4: memref<3xf32, #tpu.memory_space<smem>>, %arg5: memref<1x2x12x512xf32, #tpu.memory_space<vmem>>) attributes {dimension_semantics = [#tpu.dimension_semantics<arbitrary>, #tpu.dimension_semantics<arbitrary>], iteration_bounds = array<i64: 1, 1>, scalar_prefetch = 0 : i64, scratch_operands = 0 : i64, tpu.core_type = #tpu.core_type<tc>, window_params = [{pipeline_mode = #tpu.pipeline_mode<synchronous>, transform_indices = @transform_0, window_bounds = array<i64: 1, 8, 512>}, {transform_indices = @transform_1, window_bounds = array<i64: 3, 3>}, {transform_indices = @transform_2, window_bounds = array<i64: 3>}, {transform_indices = @transform_3, window_bounds = array<i64: 1, 2, 12, 512>}]} {
    %c512_i32 = arith.constant 512 : i32
    %0 = arith.muli %arg1, %c512_i32 : i32
    %c0_i32 = arith.constant 0 : i32
    %1 = arith.addi %0, %c0_i32 : i32
    %2 = tpu.assume_multiple %1, 128 : i32
    %c0 = arith.constant 0 : index
    %c0_0 = arith.constant 0 : index
    %3 = arith.index_cast %2 : i32 to index
    %4 = vector.load %arg2[%c0, %c0_0, %3] : memref<1x8x512xf32, #tpu.memory_space<vmem>>, vector<1x8x512xf32>
    %5 = vector.shape_cast %4 : vector<1x8x512xf32> to vector<8x512xf32>
    %c1_i32 = arith.constant 1 : i32
    %6 = tpu.dynamic_rotate %5 by %c1_i32 dim 1 : vector<8x512xf32>, i32 -> vector<8x512xf32>
    %c511_i32 = arith.constant 511 : i32
    %7 = tpu.dynamic_rotate %5 by %c511_i32 dim 1 : vector<8x512xf32>, i32 -> vector<8x512xf32>
    %c128_i32 = arith.constant 128 : i32
    %8 = arith.subi %2, %c128_i32 : i32
    %c0_i32_1 = arith.constant 0 : i32
    %9 = arith.maxsi %8, %c0_i32_1 : i32
    %10 = tpu.assume_multiple %9, 128 : i32
    %c512_i32_2 = arith.constant 512 : i32
    %11 = arith.addi %2, %c512_i32_2 : i32
    %c384_i32 = arith.constant 384 : i32
    %12 = arith.minsi %11, %c384_i32 : i32
    %13 = tpu.assume_multiple %12, 128 : i32
    %c0_3 = arith.constant 0 : index
    %c0_4 = arith.constant 0 : index
    %14 = arith.index_cast %10 : i32 to index
    %15 = vector.load %arg2[%c0_3, %c0_4, %14] : memref<1x8x512xf32, #tpu.memory_space<vmem>>, vector<1x8x128xf32>
    %16 = vector.shape_cast %15 : vector<1x8x128xf32> to vector<8x128xf32>
    %17 = vector.extract_strided_slice %16 {offsets = [0, 127], sizes = [8, 1], strides = [1, 1]} : vector<8x128xf32> to vector<8x1xf32>
    %c0_5 = arith.constant 0 : index
    %c0_6 = arith.constant 0 : index
    %18 = arith.index_cast %13 : i32 to index
    %19 = vector.load %arg2[%c0_5, %c0_6, %18] : memref<1x8x512xf32, #tpu.memory_space<vmem>>, vector<1x8x128xf32>
    %20 = vector.shape_cast %19 : vector<1x8x128xf32> to vector<8x128xf32>
    %21 = vector.extract_strided_slice %20 {offsets = [0, 0], sizes = [8, 1], strides = [1, 1]} : vector<8x128xf32> to vector<8x1xf32>
    %c0_i32_7 = arith.constant 0 : i32
    %22 = arith.cmpi eq, %arg1, %c0_i32_7 : i32
    %cst = arith.constant 0.000000e+00 : f32
    %23 = vector.broadcast %cst : f32 to vector<8x1xf32>
    %24 = arith.select %22, %23, %17 : vector<8x1xf32>
    %c0_i32_8 = arith.constant 0 : i32
    %25 = arith.cmpi eq, %arg1, %c0_i32_8 : i32
    %cst_9 = arith.constant 0.000000e+00 : f32
    %26 = vector.broadcast %cst_9 : f32 to vector<8x1xf32>
    %27 = arith.select %25, %26, %21 : vector<8x1xf32>
    %28 = vector.extract_strided_slice %5 {offsets = [0, 0], sizes = [8, 1], strides = [1, 1]} : vector<8x512xf32> to vector<8x1xf32>
    %29 = vector.extract_strided_slice %5 {offsets = [0, 1], sizes = [8, 1], strides = [1, 1]} : vector<8x512xf32> to vector<8x1xf32>
    %30 = vector.extract_strided_slice %5 {offsets = [0, 510], sizes = [8, 1], strides = [1, 1]} : vector<8x512xf32> to vector<8x1xf32>
    %31 = vector.extract_strided_slice %5 {offsets = [0, 511], sizes = [8, 1], strides = [1, 1]} : vector<8x512xf32> to vector<8x1xf32>
    %c0_10 = arith.constant 0 : index
    %c0_11 = arith.constant 0 : index
    %32 = memref.load %arg3[%c0_10, %c0_11] : memref<3x3xf32, #tpu.memory_space<smem>>
    %c0_12 = arith.constant 0 : index
    %c1 = arith.constant 1 : index
    %33 = memref.load %arg3[%c0_12, %c1] : memref<3x3xf32, #tpu.memory_space<smem>>
    %c0_13 = arith.constant 0 : index
    %c2 = arith.constant 2 : index
    %34 = memref.load %arg3[%c0_13, %c2] : memref<3x3xf32, #tpu.memory_space<smem>>
    %c0_14 = arith.constant 0 : index
    %35 = memref.load %arg4[%c0_14] : memref<3xf32, #tpu.memory_space<smem>>
    %36 = vector.broadcast %32 : f32 to vector<8x512xf32>
    %37 = arith.mulf %36, %6 : vector<8x512xf32>
    %38 = vector.broadcast %33 : f32 to vector<8x512xf32>
    %39 = arith.mulf %38, %5 : vector<8x512xf32>
    %40 = arith.addf %37, %39 : vector<8x512xf32>
    %41 = vector.broadcast %34 : f32 to vector<8x512xf32>
    %42 = arith.mulf %41, %7 : vector<8x512xf32>
    %43 = arith.addf %40, %42 : vector<8x512xf32>
    %44 = vector.broadcast %35 : f32 to vector<8x512xf32>
    %45 = arith.addf %43, %44 : vector<8x512xf32>
    %46 = vector.broadcast %32 : f32 to vector<8x1xf32>
    %47 = arith.mulf %46, %24 : vector<8x1xf32>
    %48 = vector.broadcast %33 : f32 to vector<8x1xf32>
    %49 = arith.mulf %48, %28 : vector<8x1xf32>
    %50 = arith.addf %47, %49 : vector<8x1xf32>
    %51 = vector.broadcast %34 : f32 to vector<8x1xf32>
    %52 = arith.mulf %51, %29 : vector<8x1xf32>
    %53 = arith.addf %50, %52 : vector<8x1xf32>
    %54 = vector.broadcast %35 : f32 to vector<8x1xf32>
    %55 = arith.addf %53, %54 : vector<8x1xf32>
    %56 = vector.broadcast %32 : f32 to vector<8x1xf32>
    %57 = arith.mulf %56, %30 : vector<8x1xf32>
    %58 = vector.broadcast %33 : f32 to vector<8x1xf32>
    %59 = arith.mulf %58, %31 : vector<8x1xf32>
    %60 = arith.addf %57, %59 : vector<8x1xf32>
    %61 = vector.broadcast %34 : f32 to vector<8x1xf32>
    %62 = arith.mulf %61, %27 : vector<8x1xf32>
    %63 = arith.addf %60, %62 : vector<8x1xf32>
    %64 = vector.broadcast %35 : f32 to vector<8x1xf32>
    %65 = arith.addf %63, %64 : vector<8x1xf32>
    %66 = vector.extract_strided_slice %45 {offsets = [0, 0], sizes = [4, 512], strides = [1, 1]} : vector<8x512xf32> to vector<4x512xf32>
    %c0_15 = arith.constant 0 : index
    %c0_16 = arith.constant 0 : index
    %c0_17 = arith.constant 0 : index
    %c0_18 = arith.constant 0 : index
    %67 = vector.load %arg5[%c0_15, %c0_16, %c0_17, %c0_18] : memref<1x2x12x512xf32, #tpu.memory_space<vmem>>, vector<1x1x4x512xf32>
    %68 = vector.shape_cast %67 : vector<1x1x4x512xf32> to vector<4x512xf32>
    %69 = vector.shape_cast %66 : vector<4x512xf32> to vector<1x1x4x512xf32>
    tpu.vector_store %arg5[%c0_15, %c0_16, %c0_17, %c0_18], %69 {strides = array<i32>} : memref<1x2x12x512xf32, #tpu.memory_space<vmem>>, vector<1x1x4x512xf32>,
    %70 = vector.extract_strided_slice %55 {offsets = [0, 0], sizes = [4, 1], strides = [1, 1]} : vector<8x1xf32> to vector<4x1xf32>
    %c0_19 = arith.constant 0 : index
    %c0_20 = arith.constant 0 : index
    %c0_21 = arith.constant 0 : index
    %c0_22 = arith.constant 0 : index
    %71 = vector.load %arg5[%c0_19, %c0_20, %c0_21, %c0_22] : memref<1x2x12x512xf32, #tpu.memory_space<vmem>>, vector<1x1x4x1xf32>
    %72 = vector.shape_cast %71 : vector<1x1x4x1xf32> to vector<4x1xf32>
    %73 = vector.shape_cast %70 : vector<4x1xf32> to vector<1x1x4x1xf32>
    tpu.vector_store %arg5[%c0_19, %c0_20, %c0_21, %c0_22], %73 {strides = array<i32>} : memref<1x2x12x512xf32, #tpu.memory_space<vmem>>, vector<1x1x4x1xf32>,
    %74 = vector.extract_strided_slice %65 {offsets = [0, 0], sizes = [4, 1], strides = [1, 1]} : vector<8x1xf32> to vector<4x1xf32>
    %c0_23 = arith.constant 0 : index
    %c0_24 = arith.constant 0 : index
    %c0_25 = arith.constant 0 : index
    %c511 = arith.constant 511 : index
    %75 = vector.load %arg5[%c0_23, %c0_24, %c0_25, %c511] : memref<1x2x12x512xf32, #tpu.memory_space<vmem>>, vector<1x1x4x1xf32>
    %76 = vector.shape_cast %75 : vector<1x1x4x1xf32> to vector<4x1xf32>
    %77 = vector.shape_cast %74 : vector<4x1xf32> to vector<1x1x4x1xf32>
    tpu.vector_store %arg5[%c0_23, %c0_24, %c0_25, %c511], %77 {strides = array<i32>} : memref<1x2x12x512xf32, #tpu.memory_space<vmem>>, vector<1x1x4x1xf32>,
    %78 = vector.extract_strided_slice %45 {offsets = [4, 0], sizes = [4, 512], strides = [1, 1]} : vector<8x512xf32> to vector<4x512xf32>
    %c0_26 = arith.constant 0 : index
    %c1_27 = arith.constant 1 : index
    %c0_28 = arith.constant 0 : index
    %c0_29 = arith.constant 0 : index
    %79 = vector.load %arg5[%c0_26, %c1_27, %c0_28, %c0_29] : memref<1x2x12x512xf32, #tpu.memory_space<vmem>>, vector<1x1x4x512xf32>
    %80 = vector.shape_cast %79 : vector<1x1x4x512xf32> to vector<4x512xf32>
    %81 = vector.shape_cast %78 : vector<4x512xf32> to vector<1x1x4x512xf32>
    tpu.vector_store %arg5[%c0_26, %c1_27, %c0_28, %c0_29], %81 {strides = array<i32>} : memref<1x2x12x512xf32, #tpu.memory_space<vmem>>, vector<1x1x4x512xf32>,
    %82 = vector.extract_strided_slice %55 {offsets = [4, 0], sizes = [4, 1], strides = [1, 1]} : vector<8x1xf32> to vector<4x1xf32>
    %c0_30 = arith.constant 0 : index
    %c1_31 = arith.constant 1 : index
    %c0_32 = arith.constant 0 : index
    %c0_33 = arith.constant 0 : index
    %83 = vector.load %arg5[%c0_30, %c1_31, %c0_32, %c0_33] : memref<1x2x12x512xf32, #tpu.memory_space<vmem>>, vector<1x1x4x1xf32>
    %84 = vector.shape_cast %83 : vector<1x1x4x1xf32> to vector<4x1xf32>
    %85 = vector.shape_cast %82 : vector<4x1xf32> to vector<1x1x4x1xf32>
    tpu.vector_store %arg5[%c0_30, %c1_31, %c0_32, %c0_33], %85 {strides = array<i32>} : memref<1x2x12x512xf32, #tpu.memory_space<vmem>>, vector<1x1x4x1xf32>,
    %86 = vector.extract_strided_slice %65 {offsets = [4, 0], sizes = [4, 1], strides = [1, 1]} : vector<8x1xf32> to vector<4x1xf32>
    %c0_34 = arith.constant 0 : index
    %c1_35 = arith.constant 1 : index
    %c0_36 = arith.constant 0 : index
    %c511_37 = arith.constant 511 : index
    %87 = vector.load %arg5[%c0_34, %c1_35, %c0_36, %c511_37] : memref<1x2x12x512xf32, #tpu.memory_space<vmem>>, vector<1x1x4x1xf32>
    %88 = vector.shape_cast %87 : vector<1x1x4x1xf32> to vector<4x1xf32>
    %89 = vector.shape_cast %86 : vector<4x1xf32> to vector<1x1x4x1xf32>
    tpu.vector_store %arg5[%c0_34, %c1_35, %c0_36, %c511_37], %89 {strides = array<i32>} : memref<1x2x12x512xf32, #tpu.memory_space<vmem>>, vector<1x1x4x1xf32>,
    %c1_38 = arith.constant 1 : index
    %c0_39 = arith.constant 0 : index
    %90 = memref.load %arg3[%c1_38, %c0_39] : memref<3x3xf32, #tpu.memory_space<smem>>
    %c1_40 = arith.constant 1 : index
    %c1_41 = arith.constant 1 : index
    %91 = memref.load %arg3[%c1_40, %c1_41] : memref<3x3xf32, #tpu.memory_space<smem>>
    %c1_42 = arith.constant 1 : index
    %c2_43 = arith.constant 2 : index
    %92 = memref.load %arg3[%c1_42, %c2_43] : memref<3x3xf32, #tpu.memory_space<smem>>
    %c1_44 = arith.constant 1 : index
    %93 = memref.load %arg4[%c1_44] : memref<3xf32, #tpu.memory_space<smem>>
    %94 = vector.broadcast %90 : f32 to vector<8x512xf32>
    %95 = arith.mulf %94, %6 : vector<8x512xf32>
    %96 = vector.broadcast %91 : f32 to vector<8x512xf32>
    %97 = arith.mulf %96, %5 : vector<8x512xf32>
    %98 = arith.addf %95, %97 : vector<8x512xf32>
    %99 = vector.broadcast %92 : f32 to vector<8x512xf32>
    %100 = arith.mulf %99, %7 : vector<8x512xf32>
    %101 = arith.addf %98, %100 : vector<8x512xf32>
    %102 = vector.broadcast %93 : f32 to vector<8x512xf32>
    %103 = arith.addf %101, %102 : vector<8x512xf32>
    %104 = vector.broadcast %90 : f32 to vector<8x1xf32>
    %105 = arith.mulf %104, %24 : vector<8x1xf32>
    %106 = vector.broadcast %91 : f32 to vector<8x1xf32>
    %107 = arith.mulf %106, %28 : vector<8x1xf32>
    %108 = arith.addf %105, %107 : vector<8x1xf32>
    %109 = vector.broadcast %92 : f32 to vector<8x1xf32>
    %110 = arith.mulf %109, %29 : vector<8x1xf32>
    %111 = arith.addf %108, %110 : vector<8x1xf32>
    %112 = vector.broadcast %93 : f32 to vector<8x1xf32>
    %113 = arith.addf %111, %112 : vector<8x1xf32>
    %114 = vector.broadcast %90 : f32 to vector<8x1xf32>
    %115 = arith.mulf %114, %30 : vector<8x1xf32>
    %116 = vector.broadcast %91 : f32 to vector<8x1xf32>
    %117 = arith.mulf %116, %31 : vector<8x1xf32>
    %118 = arith.addf %115, %117 : vector<8x1xf32>
    %119 = vector.broadcast %92 : f32 to vector<8x1xf32>
    %120 = arith.mulf %119, %27 : vector<8x1xf32>
    %121 = arith.addf %118, %120 : vector<8x1xf32>
    %122 = vector.broadcast %93 : f32 to vector<8x1xf32>
    %123 = arith.addf %121, %122 : vector<8x1xf32>
    %124 = vector.extract_strided_slice %103 {offsets = [0, 0], sizes = [4, 512], strides = [1, 1]} : vector<8x512xf32> to vector<4x512xf32>
    %c0_45 = arith.constant 0 : index
    %c0_46 = arith.constant 0 : index
    %c4 = arith.constant 4 : index
    %c0_47 = arith.constant 0 : index
    %125 = vector.load %arg5[%c0_45, %c0_46, %c4, %c0_47] : memref<1x2x12x512xf32, #tpu.memory_space<vmem>>, vector<1x1x4x512xf32>
    %126 = vector.shape_cast %125 : vector<1x1x4x512xf32> to vector<4x512xf32>
    %127 = vector.shape_cast %124 : vector<4x512xf32> to vector<1x1x4x512xf32>
    tpu.vector_store %arg5[%c0_45, %c0_46, %c4, %c0_47], %127 {strides = array<i32>} : memref<1x2x12x512xf32, #tpu.memory_space<vmem>>, vector<1x1x4x512xf32>,
    %128 = vector.extract_strided_slice %113 {offsets = [0, 0], sizes = [4, 1], strides = [1, 1]} : vector<8x1xf32> to vector<4x1xf32>
    %c0_48 = arith.constant 0 : index
    %c0_49 = arith.constant 0 : index
    %c4_50 = arith.constant 4 : index
    %c0_51 = arith.constant 0 : index
    %129 = vector.load %arg5[%c0_48, %c0_49, %c4_50, %c0_51] : memref<1x2x12x512xf32, #tpu.memory_space<vmem>>, vector<1x1x4x1xf32>
    %130 = vector.shape_cast %129 : vector<1x1x4x1xf32> to vector<4x1xf32>
    %131 = vector.shape_cast %128 : vector<4x1xf32> to vector<1x1x4x1xf32>
    tpu.vector_store %arg5[%c0_48, %c0_49, %c4_50, %c0_51], %131 {strides = array<i32>} : memref<1x2x12x512xf32, #tpu.memory_space<vmem>>, vector<1x1x4x1xf32>,
    %132 = vector.extract_strided_slice %123 {offsets = [0, 0], sizes = [4, 1], strides = [1, 1]} : vector<8x1xf32> to vector<4x1xf32>
    %c0_52 = arith.constant 0 : index
    %c0_53 = arith.constant 0 : index
    %c4_54 = arith.constant 4 : index
    %c511_55 = arith.constant 511 : index
    %133 = vector.load %arg5[%c0_52, %c0_53, %c4_54, %c511_55] : memref<1x2x12x512xf32, #tpu.memory_space<vmem>>, vector<1x1x4x1xf32>
    %134 = vector.shape_cast %133 : vector<1x1x4x1xf32> to vector<4x1xf32>
    %135 = vector.shape_cast %132 : vector<4x1xf32> to vector<1x1x4x1xf32>
    tpu.vector_store %arg5[%c0_52, %c0_53, %c4_54, %c511_55], %135 {strides = array<i32>} : memref<1x2x12x512xf32, #tpu.memory_space<vmem>>, vector<1x1x4x1xf32>,
    %136 = vector.extract_strided_slice %103 {offsets = [4, 0], sizes = [4, 512], strides = [1, 1]} : vector<8x512xf32> to vector<4x512xf32>
    %c0_56 = arith.constant 0 : index
    %c1_57 = arith.constant 1 : index
    %c4_58 = arith.constant 4 : index
    %c0_59 = arith.constant 0 : index
    %137 = vector.load %arg5[%c0_56, %c1_57, %c4_58, %c0_59] : memref<1x2x12x512xf32, #tpu.memory_space<vmem>>, vector<1x1x4x512xf32>
    %138 = vector.shape_cast %137 : vector<1x1x4x512xf32> to vector<4x512xf32>
    %139 = vector.shape_cast %136 : vector<4x512xf32> to vector<1x1x4x512xf32>
    tpu.vector_store %arg5[%c0_56, %c1_57, %c4_58, %c0_59], %139 {strides = array<i32>} : memref<1x2x12x512xf32, #tpu.memory_space<vmem>>, vector<1x1x4x512xf32>,
    %140 = vector.extract_strided_slice %113 {offsets = [4, 0], sizes = [4, 1], strides = [1, 1]} : vector<8x1xf32> to vector<4x1xf32>
    %c0_60 = arith.constant 0 : index
    %c1_61 = arith.constant 1 : index
    %c4_62 = arith.constant 4 : index
    %c0_63 = arith.constant 0 : index
    %141 = vector.load %arg5[%c0_60, %c1_61, %c4_62, %c0_63] : memref<1x2x12x512xf32, #tpu.memory_space<vmem>>, vector<1x1x4x1xf32>
    %142 = vector.shape_cast %141 : vector<1x1x4x1xf32> to vector<4x1xf32>
    %143 = vector.shape_cast %140 : vector<4x1xf32> to vector<1x1x4x1xf32>
    tpu.vector_store %arg5[%c0_60, %c1_61, %c4_62, %c0_63], %143 {strides = array<i32>} : memref<1x2x12x512xf32, #tpu.memory_space<vmem>>, vector<1x1x4x1xf32>,
    %144 = vector.extract_strided_slice %123 {offsets = [4, 0], sizes = [4, 1], strides = [1, 1]} : vector<8x1xf32> to vector<4x1xf32>
    %c0_64 = arith.constant 0 : index
    %c1_65 = arith.constant 1 : index
    %c4_66 = arith.constant 4 : index
    %c511_67 = arith.constant 511 : index
    %145 = vector.load %arg5[%c0_64, %c1_65, %c4_66, %c511_67] : memref<1x2x12x512xf32, #tpu.memory_space<vmem>>, vector<1x1x4x1xf32>
    %146 = vector.shape_cast %145 : vector<1x1x4x1xf32> to vector<4x1xf32>
    %147 = vector.shape_cast %144 : vector<4x1xf32> to vector<1x1x4x1xf32>
    tpu.vector_store %arg5[%c0_64, %c1_65, %c4_66, %c511_67], %147 {strides = array<i32>} : memref<1x2x12x512xf32, #tpu.memory_space<vmem>>, vector<1x1x4x1xf32>,
    %c2_68 = arith.constant 2 : index
    %c0_69 = arith.constant 0 : index
    %148 = memref.load %arg3[%c2_68, %c0_69] : memref<3x3xf32, #tpu.memory_space<smem>>
    %c2_70 = arith.constant 2 : index
    %c1_71 = arith.constant 1 : index
    %149 = memref.load %arg3[%c2_70, %c1_71] : memref<3x3xf32, #tpu.memory_space<smem>>
    %c2_72 = arith.constant 2 : index
    %c2_73 = arith.constant 2 : index
    %150 = memref.load %arg3[%c2_72, %c2_73] : memref<3x3xf32, #tpu.memory_space<smem>>
    %c2_74 = arith.constant 2 : index
    %151 = memref.load %arg4[%c2_74] : memref<3xf32, #tpu.memory_space<smem>>
    %152 = vector.broadcast %148 : f32 to vector<8x512xf32>
    %153 = arith.mulf %152, %6 : vector<8x512xf32>
    %154 = vector.broadcast %149 : f32 to vector<8x512xf32>
    %155 = arith.mulf %154, %5 : vector<8x512xf32>
    %156 = arith.addf %153, %155 : vector<8x512xf32>
    %157 = vector.broadcast %150 : f32 to vector<8x512xf32>
    %158 = arith.mulf %157, %7 : vector<8x512xf32>
    %159 = arith.addf %156, %158 : vector<8x512xf32>
    %160 = vector.broadcast %151 : f32 to vector<8x512xf32>
    %161 = arith.addf %159, %160 : vector<8x512xf32>
    %162 = vector.broadcast %148 : f32 to vector<8x1xf32>
    %163 = arith.mulf %162, %24 : vector<8x1xf32>
    %164 = vector.broadcast %149 : f32 to vector<8x1xf32>
    %165 = arith.mulf %164, %28 : vector<8x1xf32>
    %166 = arith.addf %163, %165 : vector<8x1xf32>
    %167 = vector.broadcast %150 : f32 to vector<8x1xf32>
    %168 = arith.mulf %167, %29 : vector<8x1xf32>
    %169 = arith.addf %166, %168 : vector<8x1xf32>
    %170 = vector.broadcast %151 : f32 to vector<8x1xf32>
    %171 = arith.addf %169, %170 : vector<8x1xf32>
    %172 = vector.broadcast %148 : f32 to vector<8x1xf32>
    %173 = arith.mulf %172, %30 : vector<8x1xf32>
    %174 = vector.broadcast %149 : f32 to vector<8x1xf32>
    %175 = arith.mulf %174, %31 : vector<8x1xf32>
    %176 = arith.addf %173, %175 : vector<8x1xf32>
    %177 = vector.broadcast %150 : f32 to vector<8x1xf32>
    %178 = arith.mulf %177, %27 : vector<8x1xf32>
    %179 = arith.addf %176, %178 : vector<8x1xf32>
    %180 = vector.broadcast %151 : f32 to vector<8x1xf32>
    %181 = arith.addf %179, %180 : vector<8x1xf32>
    %182 = vector.extract_strided_slice %161 {offsets = [0, 0], sizes = [4, 512], strides = [1, 1]} : vector<8x512xf32> to vector<4x512xf32>
    %c0_75 = arith.constant 0 : index
    %c0_76 = arith.constant 0 : index
    %c8 = arith.constant 8 : index
    %c0_77 = arith.constant 0 : index
    %183 = vector.load %arg5[%c0_75, %c0_76, %c8, %c0_77] : memref<1x2x12x512xf32, #tpu.memory_space<vmem>>, vector<1x1x4x512xf32>
    %184 = vector.shape_cast %183 : vector<1x1x4x512xf32> to vector<4x512xf32>
    %185 = vector.shape_cast %182 : vector<4x512xf32> to vector<1x1x4x512xf32>
    tpu.vector_store %arg5[%c0_75, %c0_76, %c8, %c0_77], %185 {strides = array<i32>} : memref<1x2x12x512xf32, #tpu.memory_space<vmem>>, vector<1x1x4x512xf32>,
    %186 = vector.extract_strided_slice %171 {offsets = [0, 0], sizes = [4, 1], strides = [1, 1]} : vector<8x1xf32> to vector<4x1xf32>
    %c0_78 = arith.constant 0 : index
    %c0_79 = arith.constant 0 : index
    %c8_80 = arith.constant 8 : index
    %c0_81 = arith.constant 0 : index
    %187 = vector.load %arg5[%c0_78, %c0_79, %c8_80, %c0_81] : memref<1x2x12x512xf32, #tpu.memory_space<vmem>>, vector<1x1x4x1xf32>
    %188 = vector.shape_cast %187 : vector<1x1x4x1xf32> to vector<4x1xf32>
    %189 = vector.shape_cast %186 : vector<4x1xf32> to vector<1x1x4x1xf32>
    tpu.vector_store %arg5[%c0_78, %c0_79, %c8_80, %c0_81], %189 {strides = array<i32>} : memref<1x2x12x512xf32, #tpu.memory_space<vmem>>, vector<1x1x4x1xf32>,
    %190 = vector.extract_strided_slice %181 {offsets = [0, 0], sizes = [4, 1], strides = [1, 1]} : vector<8x1xf32> to vector<4x1xf32>
    %c0_82 = arith.constant 0 : index
    %c0_83 = arith.constant 0 : index
    %c8_84 = arith.constant 8 : index
    %c511_85 = arith.constant 511 : index
    %191 = vector.load %arg5[%c0_82, %c0_83, %c8_84, %c511_85] : memref<1x2x12x512xf32, #tpu.memory_space<vmem>>, vector<1x1x4x1xf32>
    %192 = vector.shape_cast %191 : vector<1x1x4x1xf32> to vector<4x1xf32>
    %193 = vector.shape_cast %190 : vector<4x1xf32> to vector<1x1x4x1xf32>
    tpu.vector_store %arg5[%c0_82, %c0_83, %c8_84, %c511_85], %193 {strides = array<i32>} : memref<1x2x12x512xf32, #tpu.memory_space<vmem>>, vector<1x1x4x1xf32>,
    %194 = vector.extract_strided_slice %161 {offsets = [4, 0], sizes = [4, 512], strides = [1, 1]} : vector<8x512xf32> to vector<4x512xf32>
    %c0_86 = arith.constant 0 : index
    %c1_87 = arith.constant 1 : index
    %c8_88 = arith.constant 8 : index
    %c0_89 = arith.constant 0 : index
    %195 = vector.load %arg5[%c0_86, %c1_87, %c8_88, %c0_89] : memref<1x2x12x512xf32, #tpu.memory_space<vmem>>, vector<1x1x4x512xf32>
    %196 = vector.shape_cast %195 : vector<1x1x4x512xf32> to vector<4x512xf32>
    %197 = vector.shape_cast %194 : vector<4x512xf32> to vector<1x1x4x512xf32>
    tpu.vector_store %arg5[%c0_86, %c1_87, %c8_88, %c0_89], %197 {strides = array<i32>} : memref<1x2x12x512xf32, #tpu.memory_space<vmem>>, vector<1x1x4x512xf32>,
    %198 = vector.extract_strided_slice %171 {offsets = [4, 0], sizes = [4, 1], strides = [1, 1]} : vector<8x1xf32> to vector<4x1xf32>
    %c0_90 = arith.constant 0 : index
    %c1_91 = arith.constant 1 : index
    %c8_92 = arith.constant 8 : index
    %c0_93 = arith.constant 0 : index
    %199 = vector.load %arg5[%c0_90, %c1_91, %c8_92, %c0_93] : memref<1x2x12x512xf32, #tpu.memory_space<vmem>>, vector<1x1x4x1xf32>
    %200 = vector.shape_cast %199 : vector<1x1x4x1xf32> to vector<4x1xf32>
    %201 = vector.shape_cast %198 : vector<4x1xf32> to vector<1x1x4x1xf32>
    tpu.vector_store %arg5[%c0_90, %c1_91, %c8_92, %c0_93], %201 {strides = array<i32>} : memref<1x2x12x512xf32, #tpu.memory_space<vmem>>, vector<1x1x4x1xf32>,
    %202 = vector.extract_strided_slice %181 {offsets = [4, 0], sizes = [4, 1], strides = [1, 1]} : vector<8x1xf32> to vector<4x1xf32>
    %c0_94 = arith.constant 0 : index
    %c1_95 = arith.constant 1 : index
    %c8_96 = arith.constant 8 : index
    %c511_97 = arith.constant 511 : index
    %203 = vector.load %arg5[%c0_94, %c1_95, %c8_96, %c511_97] : memref<1x2x12x512xf32, #tpu.memory_space<vmem>>, vector<1x1x4x1xf32>
    %204 = vector.shape_cast %203 : vector<1x1x4x1xf32> to vector<4x1xf32>
    %205 = vector.shape_cast %202 : vector<4x1xf32> to vector<1x1x4x1xf32>
    tpu.vector_store %arg5[%c0_94, %c1_95, %c8_96, %c511_97], %205 {strides = array<i32>} : memref<1x2x12x512xf32, #tpu.memory_space<vmem>>, vector<1x1x4x1xf32>,
    return
  }
  func.func @transform_0(%arg0: i32, %arg1: i32) -> (i32, i32, i32) {
    %c0_i32 = arith.constant 0 : i32
    %c0_i32_0 = arith.constant 0 : i32
    %c0_i32_1 = arith.constant 0 : i32
    return %arg0, %c0_i32, %c0_i32_0 : i32, i32, i32
  }
  func.func @transform_1(%arg0: i32, %arg1: i32) -> (i32, i32) {
    %c0_i32 = arith.constant 0 : i32
    %c0_i32_0 = arith.constant 0 : i32
    %c0_i32_1 = arith.constant 0 : i32
    return %c0_i32, %c0_i32_0 : i32, i32
  }
  func.func @transform_2(%arg0: i32, %arg1: i32) -> i32 {
    %c0_i32 = arith.constant 0 : i32
    %c0_i32_0 = arith.constant 0 : i32
    return %c0_i32 : i32
  }
  func.func @transform_3(%arg0: i32, %arg1: i32) -> (i32, i32, i32, i32) {
    %c0_i32 = arith.constant 0 : i32
    %c0_i32_0 = arith.constant 0 : i32
    %c0_i32_1 = arith.constant 0 : i32
    return %arg0, %c0_i32, %c0_i32_0, %arg1 : i32, i32, i32, i32
  }
}

module attributes {stable_mosaic.version = 11 : i64} {
  func.func @_sep_conv_kernel(%arg0: i32, %arg1: i32, %arg2: memref<1x8x512xf32, #tpu.memory_space<vmem>>, %arg3: memref<3x3xf32, #tpu.memory_space<smem>>, %arg4: memref<3xf32, #tpu.memory_space<smem>>, %arg5: memref<1x2x12x512xf32, #tpu.memory_space<vmem>>) attributes {dimension_semantics = [#tpu.dimension_semantics<arbitrary>, #tpu.dimension_semantics<arbitrary>], iteration_bounds = array<i64: 1, 1>, scalar_prefetch = 0 : i64, scratch_operands = 0 : i64, tpu.core_type = #tpu.core_type<tc>, window_params = [{transform_indices = @transform_0, window_bounds = array<i64: 1, 8, 512>}, {transform_indices = @transform_1, window_bounds = array<i64: 3, 3>}, {transform_indices = @transform_2, window_bounds = array<i64: 3>}, {transform_indices = @transform_3, window_bounds = array<i64: 1, 2, 12, 512>}]} {
    %c512_i32 = arith.constant 512 : i32
    %0 = arith.muli %arg1, %c512_i32 : i32
    %c0_i32 = arith.constant 0 : i32
    %1 = arith.addi %0, %c0_i32 : i32
    %2 = tpu.assume_multiple %1, 128 : i32
    %c0 = arith.constant 0 : index
    %c0_0 = arith.constant 0 : index
    %3 = arith.index_cast %2 : i32 to index
    %4 = vector.load %arg2[%c0, %c0_0, %3] : memref<1x8x512xf32, #tpu.memory_space<vmem>>, vector<1x8x512xf32>
    %5 = vector.shape_cast %4 : vector<1x8x512xf32> to vector<8x512xf32>
    %c1_i32 = arith.constant 1 : i32
    %6 = tpu.dynamic_rotate %5 by %c1_i32 dim 1 : vector<8x512xf32>, i32 -> vector<8x512xf32>
    %c511_i32 = arith.constant 511 : i32
    %7 = tpu.dynamic_rotate %5 by %c511_i32 dim 1 : vector<8x512xf32>, i32 -> vector<8x512xf32>
    %c128_i32 = arith.constant 128 : i32
    %8 = arith.subi %2, %c128_i32 : i32
    %c0_i32_1 = arith.constant 0 : i32
    %9 = arith.maxsi %8, %c0_i32_1 : i32
    %10 = tpu.assume_multiple %9, 128 : i32
    %c512_i32_2 = arith.constant 512 : i32
    %11 = arith.addi %2, %c512_i32_2 : i32
    %c384_i32 = arith.constant 384 : i32
    %12 = arith.minsi %11, %c384_i32 : i32
    %13 = tpu.assume_multiple %12, 128 : i32
    %c0_3 = arith.constant 0 : index
    %c0_4 = arith.constant 0 : index
    %14 = arith.index_cast %10 : i32 to index
    %15 = vector.load %arg2[%c0_3, %c0_4, %14] : memref<1x8x512xf32, #tpu.memory_space<vmem>>, vector<1x8x128xf32>
    %16 = vector.shape_cast %15 : vector<1x8x128xf32> to vector<8x128xf32>
    %17 = vector.extract_strided_slice %16 {offsets = [0, 127], sizes = [8, 1], strides = [1, 1]} : vector<8x128xf32> to vector<8x1xf32>
    %c0_5 = arith.constant 0 : index
    %c0_6 = arith.constant 0 : index
    %18 = arith.index_cast %13 : i32 to index
    %19 = vector.load %arg2[%c0_5, %c0_6, %18] : memref<1x8x512xf32, #tpu.memory_space<vmem>>, vector<1x8x128xf32>
    %20 = vector.shape_cast %19 : vector<1x8x128xf32> to vector<8x128xf32>
    %21 = vector.extract_strided_slice %20 {offsets = [0, 0], sizes = [8, 1], strides = [1, 1]} : vector<8x128xf32> to vector<8x1xf32>
    %c0_i32_7 = arith.constant 0 : i32
    %22 = arith.cmpi eq, %arg1, %c0_i32_7 : i32
    %cst = arith.constant 0.000000e+00 : f32
    %23 = vector.broadcast %cst : f32 to vector<8x1xf32>
    %24 = arith.select %22, %23, %17 : vector<8x1xf32>
    %c0_i32_8 = arith.constant 0 : i32
    %25 = arith.cmpi eq, %arg1, %c0_i32_8 : i32
    %cst_9 = arith.constant 0.000000e+00 : f32
    %26 = vector.broadcast %cst_9 : f32 to vector<8x1xf32>
    %27 = arith.select %25, %26, %21 : vector<8x1xf32>
    %28 = vector.extract_strided_slice %5 {offsets = [0, 0], sizes = [8, 1], strides = [1, 1]} : vector<8x512xf32> to vector<8x1xf32>
    %29 = vector.extract_strided_slice %5 {offsets = [0, 1], sizes = [8, 1], strides = [1, 1]} : vector<8x512xf32> to vector<8x1xf32>
    %30 = vector.extract_strided_slice %5 {offsets = [0, 510], sizes = [8, 1], strides = [1, 1]} : vector<8x512xf32> to vector<8x1xf32>
    %31 = vector.extract_strided_slice %5 {offsets = [0, 511], sizes = [8, 1], strides = [1, 1]} : vector<8x512xf32> to vector<8x1xf32>
    %c0_10 = arith.constant 0 : index
    %c0_11 = arith.constant 0 : index
    %32 = memref.load %arg3[%c0_10, %c0_11] : memref<3x3xf32, #tpu.memory_space<smem>>
    %c0_12 = arith.constant 0 : index
    %c1 = arith.constant 1 : index
    %33 = memref.load %arg3[%c0_12, %c1] : memref<3x3xf32, #tpu.memory_space<smem>>
    %c0_13 = arith.constant 0 : index
    %c2 = arith.constant 2 : index
    %34 = memref.load %arg3[%c0_13, %c2] : memref<3x3xf32, #tpu.memory_space<smem>>
    %c0_14 = arith.constant 0 : index
    %35 = memref.load %arg4[%c0_14] : memref<3xf32, #tpu.memory_space<smem>>
    %36 = vector.broadcast %32 : f32 to vector<8x512xf32>
    %37 = arith.mulf %36, %6 : vector<8x512xf32>
    %38 = vector.broadcast %33 : f32 to vector<8x512xf32>
    %39 = arith.mulf %38, %5 : vector<8x512xf32>
    %40 = arith.addf %37, %39 : vector<8x512xf32>
    %41 = vector.broadcast %34 : f32 to vector<8x512xf32>
    %42 = arith.mulf %41, %7 : vector<8x512xf32>
    %43 = arith.addf %40, %42 : vector<8x512xf32>
    %44 = vector.broadcast %35 : f32 to vector<8x512xf32>
    %45 = arith.addf %43, %44 : vector<8x512xf32>
    %46 = vector.broadcast %32 : f32 to vector<8x1xf32>
    %47 = arith.mulf %46, %24 : vector<8x1xf32>
    %48 = vector.broadcast %33 : f32 to vector<8x1xf32>
    %49 = arith.mulf %48, %28 : vector<8x1xf32>
    %50 = arith.addf %47, %49 : vector<8x1xf32>
    %51 = vector.broadcast %34 : f32 to vector<8x1xf32>
    %52 = arith.mulf %51, %29 : vector<8x1xf32>
    %53 = arith.addf %50, %52 : vector<8x1xf32>
    %54 = vector.broadcast %35 : f32 to vector<8x1xf32>
    %55 = arith.addf %53, %54 : vector<8x1xf32>
    %56 = vector.broadcast %32 : f32 to vector<8x1xf32>
    %57 = arith.mulf %56, %30 : vector<8x1xf32>
    %58 = vector.broadcast %33 : f32 to vector<8x1xf32>
    %59 = arith.mulf %58, %31 : vector<8x1xf32>
    %60 = arith.addf %57, %59 : vector<8x1xf32>
    %61 = vector.broadcast %34 : f32 to vector<8x1xf32>
    %62 = arith.mulf %61, %27 : vector<8x1xf32>
    %63 = arith.addf %60, %62 : vector<8x1xf32>
    %64 = vector.broadcast %35 : f32 to vector<8x1xf32>
    %65 = arith.addf %63, %64 : vector<8x1xf32>
    %66 = vector.extract_strided_slice %45 {offsets = [0, 0], sizes = [4, 512], strides = [1, 1]} : vector<8x512xf32> to vector<4x512xf32>
    %c0_15 = arith.constant 0 : index
    %c0_16 = arith.constant 0 : index
    %c0_17 = arith.constant 0 : index
    %c0_18 = arith.constant 0 : index
    %67 = vector.load %arg5[%c0_15, %c0_16, %c0_17, %c0_18] : memref<1x2x12x512xf32, #tpu.memory_space<vmem>>, vector<1x1x4x512xf32>
    %68 = vector.shape_cast %67 : vector<1x1x4x512xf32> to vector<4x512xf32>
    %69 = vector.shape_cast %66 : vector<4x512xf32> to vector<1x1x4x512xf32>
    tpu.vector_store %arg5[%c0_15, %c0_16, %c0_17, %c0_18], %69 {strides = array<i32>} : memref<1x2x12x512xf32, #tpu.memory_space<vmem>>, vector<1x1x4x512xf32>,
    %70 = vector.extract_strided_slice %55 {offsets = [0, 0], sizes = [4, 1], strides = [1, 1]} : vector<8x1xf32> to vector<4x1xf32>
    %c0_19 = arith.constant 0 : index
    %c0_20 = arith.constant 0 : index
    %c0_21 = arith.constant 0 : index
    %c0_22 = arith.constant 0 : index
    %71 = vector.load %arg5[%c0_19, %c0_20, %c0_21, %c0_22] : memref<1x2x12x512xf32, #tpu.memory_space<vmem>>, vector<1x1x4x1xf32>
    %72 = vector.shape_cast %71 : vector<1x1x4x1xf32> to vector<4x1xf32>
    %73 = vector.shape_cast %70 : vector<4x1xf32> to vector<1x1x4x1xf32>
    tpu.vector_store %arg5[%c0_19, %c0_20, %c0_21, %c0_22], %73 {strides = array<i32>} : memref<1x2x12x512xf32, #tpu.memory_space<vmem>>, vector<1x1x4x1xf32>,
    %74 = vector.extract_strided_slice %65 {offsets = [0, 0], sizes = [4, 1], strides = [1, 1]} : vector<8x1xf32> to vector<4x1xf32>
    %c0_23 = arith.constant 0 : index
    %c0_24 = arith.constant 0 : index
    %c0_25 = arith.constant 0 : index
    %c511 = arith.constant 511 : index
    %75 = vector.load %arg5[%c0_23, %c0_24, %c0_25, %c511] : memref<1x2x12x512xf32, #tpu.memory_space<vmem>>, vector<1x1x4x1xf32>
    %76 = vector.shape_cast %75 : vector<1x1x4x1xf32> to vector<4x1xf32>
    %77 = vector.shape_cast %74 : vector<4x1xf32> to vector<1x1x4x1xf32>
    tpu.vector_store %arg5[%c0_23, %c0_24, %c0_25, %c511], %77 {strides = array<i32>} : memref<1x2x12x512xf32, #tpu.memory_space<vmem>>, vector<1x1x4x1xf32>,
    %78 = vector.extract_strided_slice %45 {offsets = [4, 0], sizes = [4, 512], strides = [1, 1]} : vector<8x512xf32> to vector<4x512xf32>
    %c0_26 = arith.constant 0 : index
    %c1_27 = arith.constant 1 : index
    %c0_28 = arith.constant 0 : index
    %c0_29 = arith.constant 0 : index
    %79 = vector.load %arg5[%c0_26, %c1_27, %c0_28, %c0_29] : memref<1x2x12x512xf32, #tpu.memory_space<vmem>>, vector<1x1x4x512xf32>
    %80 = vector.shape_cast %79 : vector<1x1x4x512xf32> to vector<4x512xf32>
    %81 = vector.shape_cast %78 : vector<4x512xf32> to vector<1x1x4x512xf32>
    tpu.vector_store %arg5[%c0_26, %c1_27, %c0_28, %c0_29], %81 {strides = array<i32>} : memref<1x2x12x512xf32, #tpu.memory_space<vmem>>, vector<1x1x4x512xf32>,
    %82 = vector.extract_strided_slice %55 {offsets = [4, 0], sizes = [4, 1], strides = [1, 1]} : vector<8x1xf32> to vector<4x1xf32>
    %c0_30 = arith.constant 0 : index
    %c1_31 = arith.constant 1 : index
    %c0_32 = arith.constant 0 : index
    %c0_33 = arith.constant 0 : index
    %83 = vector.load %arg5[%c0_30, %c1_31, %c0_32, %c0_33] : memref<1x2x12x512xf32, #tpu.memory_space<vmem>>, vector<1x1x4x1xf32>
    %84 = vector.shape_cast %83 : vector<1x1x4x1xf32> to vector<4x1xf32>
    %85 = vector.shape_cast %82 : vector<4x1xf32> to vector<1x1x4x1xf32>
    tpu.vector_store %arg5[%c0_30, %c1_31, %c0_32, %c0_33], %85 {strides = array<i32>} : memref<1x2x12x512xf32, #tpu.memory_space<vmem>>, vector<1x1x4x1xf32>,
    %86 = vector.extract_strided_slice %65 {offsets = [4, 0], sizes = [4, 1], strides = [1, 1]} : vector<8x1xf32> to vector<4x1xf32>
    %c0_34 = arith.constant 0 : index
    %c1_35 = arith.constant 1 : index
    %c0_36 = arith.constant 0 : index
    %c511_37 = arith.constant 511 : index
    %87 = vector.load %arg5[%c0_34, %c1_35, %c0_36, %c511_37] : memref<1x2x12x512xf32, #tpu.memory_space<vmem>>, vector<1x1x4x1xf32>
    %88 = vector.shape_cast %87 : vector<1x1x4x1xf32> to vector<4x1xf32>
    %89 = vector.shape_cast %86 : vector<4x1xf32> to vector<1x1x4x1xf32>
    tpu.vector_store %arg5[%c0_34, %c1_35, %c0_36, %c511_37], %89 {strides = array<i32>} : memref<1x2x12x512xf32, #tpu.memory_space<vmem>>, vector<1x1x4x1xf32>,
    %c1_38 = arith.constant 1 : index
    %c0_39 = arith.constant 0 : index
    %90 = memref.load %arg3[%c1_38, %c0_39] : memref<3x3xf32, #tpu.memory_space<smem>>
    %c1_40 = arith.constant 1 : index
    %c1_41 = arith.constant 1 : index
    %91 = memref.load %arg3[%c1_40, %c1_41] : memref<3x3xf32, #tpu.memory_space<smem>>
    %c1_42 = arith.constant 1 : index
    %c2_43 = arith.constant 2 : index
    %92 = memref.load %arg3[%c1_42, %c2_43] : memref<3x3xf32, #tpu.memory_space<smem>>
    %c1_44 = arith.constant 1 : index
    %93 = memref.load %arg4[%c1_44] : memref<3xf32, #tpu.memory_space<smem>>
    %94 = vector.broadcast %90 : f32 to vector<8x512xf32>
    %95 = arith.mulf %94, %6 : vector<8x512xf32>
    %96 = vector.broadcast %91 : f32 to vector<8x512xf32>
    %97 = arith.mulf %96, %5 : vector<8x512xf32>
    %98 = arith.addf %95, %97 : vector<8x512xf32>
    %99 = vector.broadcast %92 : f32 to vector<8x512xf32>
    %100 = arith.mulf %99, %7 : vector<8x512xf32>
    %101 = arith.addf %98, %100 : vector<8x512xf32>
    %102 = vector.broadcast %93 : f32 to vector<8x512xf32>
    %103 = arith.addf %101, %102 : vector<8x512xf32>
    %104 = vector.broadcast %90 : f32 to vector<8x1xf32>
    %105 = arith.mulf %104, %24 : vector<8x1xf32>
    %106 = vector.broadcast %91 : f32 to vector<8x1xf32>
    %107 = arith.mulf %106, %28 : vector<8x1xf32>
    %108 = arith.addf %105, %107 : vector<8x1xf32>
    %109 = vector.broadcast %92 : f32 to vector<8x1xf32>
    %110 = arith.mulf %109, %29 : vector<8x1xf32>
    %111 = arith.addf %108, %110 : vector<8x1xf32>
    %112 = vector.broadcast %93 : f32 to vector<8x1xf32>
    %113 = arith.addf %111, %112 : vector<8x1xf32>
    %114 = vector.broadcast %90 : f32 to vector<8x1xf32>
    %115 = arith.mulf %114, %30 : vector<8x1xf32>
    %116 = vector.broadcast %91 : f32 to vector<8x1xf32>
    %117 = arith.mulf %116, %31 : vector<8x1xf32>
    %118 = arith.addf %115, %117 : vector<8x1xf32>
    %119 = vector.broadcast %92 : f32 to vector<8x1xf32>
    %120 = arith.mulf %119, %27 : vector<8x1xf32>
    %121 = arith.addf %118, %120 : vector<8x1xf32>
    %122 = vector.broadcast %93 : f32 to vector<8x1xf32>
    %123 = arith.addf %121, %122 : vector<8x1xf32>
    %124 = vector.extract_strided_slice %103 {offsets = [0, 0], sizes = [4, 512], strides = [1, 1]} : vector<8x512xf32> to vector<4x512xf32>
    %c0_45 = arith.constant 0 : index
    %c0_46 = arith.constant 0 : index
    %c4 = arith.constant 4 : index
    %c0_47 = arith.constant 0 : index
    %125 = vector.load %arg5[%c0_45, %c0_46, %c4, %c0_47] : memref<1x2x12x512xf32, #tpu.memory_space<vmem>>, vector<1x1x4x512xf32>
    %126 = vector.shape_cast %125 : vector<1x1x4x512xf32> to vector<4x512xf32>
    %127 = vector.shape_cast %124 : vector<4x512xf32> to vector<1x1x4x512xf32>
    tpu.vector_store %arg5[%c0_45, %c0_46, %c4, %c0_47], %127 {strides = array<i32>} : memref<1x2x12x512xf32, #tpu.memory_space<vmem>>, vector<1x1x4x512xf32>,
    %128 = vector.extract_strided_slice %113 {offsets = [0, 0], sizes = [4, 1], strides = [1, 1]} : vector<8x1xf32> to vector<4x1xf32>
    %c0_48 = arith.constant 0 : index
    %c0_49 = arith.constant 0 : index
    %c4_50 = arith.constant 4 : index
    %c0_51 = arith.constant 0 : index
    %129 = vector.load %arg5[%c0_48, %c0_49, %c4_50, %c0_51] : memref<1x2x12x512xf32, #tpu.memory_space<vmem>>, vector<1x1x4x1xf32>
    %130 = vector.shape_cast %129 : vector<1x1x4x1xf32> to vector<4x1xf32>
    %131 = vector.shape_cast %128 : vector<4x1xf32> to vector<1x1x4x1xf32>
    tpu.vector_store %arg5[%c0_48, %c0_49, %c4_50, %c0_51], %131 {strides = array<i32>} : memref<1x2x12x512xf32, #tpu.memory_space<vmem>>, vector<1x1x4x1xf32>,
    %132 = vector.extract_strided_slice %123 {offsets = [0, 0], sizes = [4, 1], strides = [1, 1]} : vector<8x1xf32> to vector<4x1xf32>
    %c0_52 = arith.constant 0 : index
    %c0_53 = arith.constant 0 : index
    %c4_54 = arith.constant 4 : index
    %c511_55 = arith.constant 511 : index
    %133 = vector.load %arg5[%c0_52, %c0_53, %c4_54, %c511_55] : memref<1x2x12x512xf32, #tpu.memory_space<vmem>>, vector<1x1x4x1xf32>
    %134 = vector.shape_cast %133 : vector<1x1x4x1xf32> to vector<4x1xf32>
    %135 = vector.shape_cast %132 : vector<4x1xf32> to vector<1x1x4x1xf32>
    tpu.vector_store %arg5[%c0_52, %c0_53, %c4_54, %c511_55], %135 {strides = array<i32>} : memref<1x2x12x512xf32, #tpu.memory_space<vmem>>, vector<1x1x4x1xf32>,
    %136 = vector.extract_strided_slice %103 {offsets = [4, 0], sizes = [4, 512], strides = [1, 1]} : vector<8x512xf32> to vector<4x512xf32>
    %c0_56 = arith.constant 0 : index
    %c1_57 = arith.constant 1 : index
    %c4_58 = arith.constant 4 : index
    %c0_59 = arith.constant 0 : index
    %137 = vector.load %arg5[%c0_56, %c1_57, %c4_58, %c0_59] : memref<1x2x12x512xf32, #tpu.memory_space<vmem>>, vector<1x1x4x512xf32>
    %138 = vector.shape_cast %137 : vector<1x1x4x512xf32> to vector<4x512xf32>
    %139 = vector.shape_cast %136 : vector<4x512xf32> to vector<1x1x4x512xf32>
    tpu.vector_store %arg5[%c0_56, %c1_57, %c4_58, %c0_59], %139 {strides = array<i32>} : memref<1x2x12x512xf32, #tpu.memory_space<vmem>>, vector<1x1x4x512xf32>,
    %140 = vector.extract_strided_slice %113 {offsets = [4, 0], sizes = [4, 1], strides = [1, 1]} : vector<8x1xf32> to vector<4x1xf32>
    %c0_60 = arith.constant 0 : index
    %c1_61 = arith.constant 1 : index
    %c4_62 = arith.constant 4 : index
    %c0_63 = arith.constant 0 : index
    %141 = vector.load %arg5[%c0_60, %c1_61, %c4_62, %c0_63] : memref<1x2x12x512xf32, #tpu.memory_space<vmem>>, vector<1x1x4x1xf32>
    %142 = vector.shape_cast %141 : vector<1x1x4x1xf32> to vector<4x1xf32>
    %143 = vector.shape_cast %140 : vector<4x1xf32> to vector<1x1x4x1xf32>
    tpu.vector_store %arg5[%c0_60, %c1_61, %c4_62, %c0_63], %143 {strides = array<i32>} : memref<1x2x12x512xf32, #tpu.memory_space<vmem>>, vector<1x1x4x1xf32>,
    %144 = vector.extract_strided_slice %123 {offsets = [4, 0], sizes = [4, 1], strides = [1, 1]} : vector<8x1xf32> to vector<4x1xf32>
    %c0_64 = arith.constant 0 : index
    %c1_65 = arith.constant 1 : index
    %c4_66 = arith.constant 4 : index
    %c511_67 = arith.constant 511 : index
    %145 = vector.load %arg5[%c0_64, %c1_65, %c4_66, %c511_67] : memref<1x2x12x512xf32, #tpu.memory_space<vmem>>, vector<1x1x4x1xf32>
    %146 = vector.shape_cast %145 : vector<1x1x4x1xf32> to vector<4x1xf32>
    %147 = vector.shape_cast %144 : vector<4x1xf32> to vector<1x1x4x1xf32>
    tpu.vector_store %arg5[%c0_64, %c1_65, %c4_66, %c511_67], %147 {strides = array<i32>} : memref<1x2x12x512xf32, #tpu.memory_space<vmem>>, vector<1x1x4x1xf32>,
    %c2_68 = arith.constant 2 : index
    %c0_69 = arith.constant 0 : index
    %148 = memref.load %arg3[%c2_68, %c0_69] : memref<3x3xf32, #tpu.memory_space<smem>>
    %c2_70 = arith.constant 2 : index
    %c1_71 = arith.constant 1 : index
    %149 = memref.load %arg3[%c2_70, %c1_71] : memref<3x3xf32, #tpu.memory_space<smem>>
    %c2_72 = arith.constant 2 : index
    %c2_73 = arith.constant 2 : index
    %150 = memref.load %arg3[%c2_72, %c2_73] : memref<3x3xf32, #tpu.memory_space<smem>>
    %c2_74 = arith.constant 2 : index
    %151 = memref.load %arg4[%c2_74] : memref<3xf32, #tpu.memory_space<smem>>
    %152 = vector.broadcast %148 : f32 to vector<8x512xf32>
    %153 = arith.mulf %152, %6 : vector<8x512xf32>
    %154 = vector.broadcast %149 : f32 to vector<8x512xf32>
    %155 = arith.mulf %154, %5 : vector<8x512xf32>
    %156 = arith.addf %153, %155 : vector<8x512xf32>
    %157 = vector.broadcast %150 : f32 to vector<8x512xf32>
    %158 = arith.mulf %157, %7 : vector<8x512xf32>
    %159 = arith.addf %156, %158 : vector<8x512xf32>
    %160 = vector.broadcast %151 : f32 to vector<8x512xf32>
    %161 = arith.addf %159, %160 : vector<8x512xf32>
    %162 = vector.broadcast %148 : f32 to vector<8x1xf32>
    %163 = arith.mulf %162, %24 : vector<8x1xf32>
    %164 = vector.broadcast %149 : f32 to vector<8x1xf32>
    %165 = arith.mulf %164, %28 : vector<8x1xf32>
    %166 = arith.addf %163, %165 : vector<8x1xf32>
    %167 = vector.broadcast %150 : f32 to vector<8x1xf32>
    %168 = arith.mulf %167, %29 : vector<8x1xf32>
    %169 = arith.addf %166, %168 : vector<8x1xf32>
    %170 = vector.broadcast %151 : f32 to vector<8x1xf32>
    %171 = arith.addf %169, %170 : vector<8x1xf32>
    %172 = vector.broadcast %148 : f32 to vector<8x1xf32>
    %173 = arith.mulf %172, %30 : vector<8x1xf32>
    %174 = vector.broadcast %149 : f32 to vector<8x1xf32>
    %175 = arith.mulf %174, %31 : vector<8x1xf32>
    %176 = arith.addf %173, %175 : vector<8x1xf32>
    %177 = vector.broadcast %150 : f32 to vector<8x1xf32>
    %178 = arith.mulf %177, %27 : vector<8x1xf32>
    %179 = arith.addf %176, %178 : vector<8x1xf32>
    %180 = vector.broadcast %151 : f32 to vector<8x1xf32>
    %181 = arith.addf %179, %180 : vector<8x1xf32>
    %182 = vector.extract_strided_slice %161 {offsets = [0, 0], sizes = [4, 512], strides = [1, 1]} : vector<8x512xf32> to vector<4x512xf32>
    %c0_75 = arith.constant 0 : index
    %c0_76 = arith.constant 0 : index
    %c8 = arith.constant 8 : index
    %c0_77 = arith.constant 0 : index
    %183 = vector.load %arg5[%c0_75, %c0_76, %c8, %c0_77] : memref<1x2x12x512xf32, #tpu.memory_space<vmem>>, vector<1x1x4x512xf32>
    %184 = vector.shape_cast %183 : vector<1x1x4x512xf32> to vector<4x512xf32>
    %185 = vector.shape_cast %182 : vector<4x512xf32> to vector<1x1x4x512xf32>
    tpu.vector_store %arg5[%c0_75, %c0_76, %c8, %c0_77], %185 {strides = array<i32>} : memref<1x2x12x512xf32, #tpu.memory_space<vmem>>, vector<1x1x4x512xf32>,
    %186 = vector.extract_strided_slice %171 {offsets = [0, 0], sizes = [4, 1], strides = [1, 1]} : vector<8x1xf32> to vector<4x1xf32>
    %c0_78 = arith.constant 0 : index
    %c0_79 = arith.constant 0 : index
    %c8_80 = arith.constant 8 : index
    %c0_81 = arith.constant 0 : index
    %187 = vector.load %arg5[%c0_78, %c0_79, %c8_80, %c0_81] : memref<1x2x12x512xf32, #tpu.memory_space<vmem>>, vector<1x1x4x1xf32>
    %188 = vector.shape_cast %187 : vector<1x1x4x1xf32> to vector<4x1xf32>
    %189 = vector.shape_cast %186 : vector<4x1xf32> to vector<1x1x4x1xf32>
    tpu.vector_store %arg5[%c0_78, %c0_79, %c8_80, %c0_81], %189 {strides = array<i32>} : memref<1x2x12x512xf32, #tpu.memory_space<vmem>>, vector<1x1x4x1xf32>,
    %190 = vector.extract_strided_slice %181 {offsets = [0, 0], sizes = [4, 1], strides = [1, 1]} : vector<8x1xf32> to vector<4x1xf32>
    %c0_82 = arith.constant 0 : index
    %c0_83 = arith.constant 0 : index
    %c8_84 = arith.constant 8 : index
    %c511_85 = arith.constant 511 : index
    %191 = vector.load %arg5[%c0_82, %c0_83, %c8_84, %c511_85] : memref<1x2x12x512xf32, #tpu.memory_space<vmem>>, vector<1x1x4x1xf32>
    %192 = vector.shape_cast %191 : vector<1x1x4x1xf32> to vector<4x1xf32>
    %193 = vector.shape_cast %190 : vector<4x1xf32> to vector<1x1x4x1xf32>
    tpu.vector_store %arg5[%c0_82, %c0_83, %c8_84, %c511_85], %193 {strides = array<i32>} : memref<1x2x12x512xf32, #tpu.memory_space<vmem>>, vector<1x1x4x1xf32>,
    %194 = vector.extract_strided_slice %161 {offsets = [4, 0], sizes = [4, 512], strides = [1, 1]} : vector<8x512xf32> to vector<4x512xf32>
    %c0_86 = arith.constant 0 : index
    %c1_87 = arith.constant 1 : index
    %c8_88 = arith.constant 8 : index
    %c0_89 = arith.constant 0 : index
    %195 = vector.load %arg5[%c0_86, %c1_87, %c8_88, %c0_89] : memref<1x2x12x512xf32, #tpu.memory_space<vmem>>, vector<1x1x4x512xf32>
    %196 = vector.shape_cast %195 : vector<1x1x4x512xf32> to vector<4x512xf32>
    %197 = vector.shape_cast %194 : vector<4x512xf32> to vector<1x1x4x512xf32>
    tpu.vector_store %arg5[%c0_86, %c1_87, %c8_88, %c0_89], %197 {strides = array<i32>} : memref<1x2x12x512xf32, #tpu.memory_space<vmem>>, vector<1x1x4x512xf32>,
    %198 = vector.extract_strided_slice %171 {offsets = [4, 0], sizes = [4, 1], strides = [1, 1]} : vector<8x1xf32> to vector<4x1xf32>
    %c0_90 = arith.constant 0 : index
    %c1_91 = arith.constant 1 : index
    %c8_92 = arith.constant 8 : index
    %c0_93 = arith.constant 0 : index
    %199 = vector.load %arg5[%c0_90, %c1_91, %c8_92, %c0_93] : memref<1x2x12x512xf32, #tpu.memory_space<vmem>>, vector<1x1x4x1xf32>
    %200 = vector.shape_cast %199 : vector<1x1x4x1xf32> to vector<4x1xf32>
    %201 = vector.shape_cast %198 : vector<4x1xf32> to vector<1x1x4x1xf32>
    tpu.vector_store %arg5[%c0_90, %c1_91, %c8_92, %c0_93], %201 {strides = array<i32>} : memref<1x2x12x512xf32, #tpu.memory_space<vmem>>, vector<1x1x4x1xf32>,
    %202 = vector.extract_strided_slice %181 {offsets = [4, 0], sizes = [4, 1], strides = [1, 1]} : vector<8x1xf32> to vector<4x1xf32>
    %c0_94 = arith.constant 0 : index
    %c1_95 = arith.constant 1 : index
    %c8_96 = arith.constant 8 : index
    %c511_97 = arith.constant 511 : index
    %203 = vector.load %arg5[%c0_94, %c1_95, %c8_96, %c511_97] : memref<1x2x12x512xf32, #tpu.memory_space<vmem>>, vector<1x1x4x1xf32>
    %204 = vector.shape_cast %203 : vector<1x1x4x1xf32> to vector<4x1xf32>
    %205 = vector.shape_cast %202 : vector<4x1xf32> to vector<1x1x4x1xf32>
    tpu.vector_store %arg5[%c0_94, %c1_95, %c8_96, %c511_97], %205 {strides = array<i32>} : memref<1x2x12x512xf32, #tpu.memory_space<vmem>>, vector<1x1x4x1xf32>,
    return
  }
  func.func @transform_0(%arg0: i32, %arg1: i32) -> (i32, i32, i32) {
    %c0_i32 = arith.constant 0 : i32
    %c0_i32_0 = arith.constant 0 : i32
    %c0_i32_1 = arith.constant 0 : i32
    return %arg0, %c0_i32, %c0_i32_0 : i32, i32, i32
  }
  func.func @transform_1(%arg0: i32, %arg1: i32) -> (i32, i32) {
    %c0_i32 = arith.constant 0 : i32
    %c0_i32_0 = arith.constant 0 : i32
    %c0_i32_1 = arith.constant 0 : i32
    return %c0_i32, %c0_i32_0 : i32, i32
  }
  func.func @transform_2(%arg0: i32, %arg1: i32) -> i32 {
    %c0_i32 = arith.constant 0 : i32
    %c0_i32_0 = arith.constant 0 : i32
    return %c0_i32 : i32
  }
  func.func @transform_3(%arg0: i32, %arg1: i32) -> (i32, i32, i32, i32) {
    %c0_i32 = arith.constant 0 : i32
    %c0_i32_0 = arith.constant 0 : i32
    %c0_i32_1 = arith.constant 0 : i32
    return %arg0, %c0_i32, %c0_i32_0, %arg1 : i32, i32, i32, i32
  }
}

</mosaic_0001>

<llo_original>
// kernel: tpu_custom_call.1
$region0: #{tpu_custom_call.1}
  #allocation0 [shape = 'u32[]', space=smem, size = 0x4, offset = 0x4, fixed_abs, tag = 'smem constant byte address 0x4 - core index']
  #allocation1 [shape = 'u32[144,128]{1,0:T(1,128)}', space=vmem, size = 0x12000, scoped, tag = 'internal scratch']
  %s0 = inlined_call_operand.hbm [shape: f32[1,8,512], index: 0, kind: input, shape index: {}]
  %s1 = inlined_call_operand.hbm [shape: f32[3,3], index: 1, kind: input, shape index: {}]
  %s2 = inlined_call_operand.vmem [shape: f32[3], index: 2, kind: input, shape index: {}]
  %s3 = inlined_call_operand.vmem [shape: f32[1,2,12,512], index: 3, kind: output, shape index: {}]
  %s4 = sld [smem:[#allocation0]]
  $region34: #{tpu_custom_call.1} parent=0
    _
  %s6 = ssub.s32 1, %s4
  %s7 = scalar_select 0, %s6, %s4
  $region1: #{tpu_custom_call.1} parent=0
    #allocation2 [shape = 'u8[16384]{0}', space=vmem, size = 0x4000, scoped, tag = 'input window, operand 0, single buffered']
    #allocation3 [shape = 's32[1]{0}', space=sflag, size = 0x4, scoped, tag = 'scoped memory for tpu_custom_call.1']
    #allocation4 [shape = 's32[1]{0}', space=sflag, size = 0x4, scoped, tag = 'scoped memory for tpu_custom_call.1']
    #allocation5 [shape = 's32[1]{0}', space=sflag, size = 0x4, scoped, tag = 'scoped memory for tpu_custom_call.1']
    #allocation6 [shape = 'u8[2048]{0}', space=smem, size = 0x800, scoped, tag = 'input window, operand 1, single buffered']
    #allocation7 [shape = 'u8[512]{0}', space=smem, size = 0x200, scoped, tag = 'input window, operand 2, single buffered']
    %8 = vsyncpa [#allocation3], 0
    %9 = vsyncpa [#allocation4], 0
    %10 = vsyncpa [#allocation5], 0
    // Predicated region
    $region2: #{tpu_custom_call.1} parent=1 // pred_check
      _
    $region3: #{tpu_custom_call.1} parent=1 // pred_check_branch
      %12 = sbr.rel (0) target = $region5
    $region4: #{tpu_custom_call.1} parent=1 // pred_region
      %s14 = ssub.s32 512, 512
      %15 = vsyncadd [#allocation3], %s14
      %s17 = sshll.u32 [#allocation2], 4
      %s18 = int_to_ptr.vmem [resolvable:$true] %s17
      %20 = dma.hbm_to_vmem [thread:$0]  %s0, 512, %s18, [#allocation3]
    $region5: #{tpu_custom_call.1} parent=1 // pred_fallthru
      _
    // Predicated region
    $region6: #{tpu_custom_call.1} parent=1 // pred_check
      _
    $region7: #{tpu_custom_call.1} parent=1 // pred_check_branch
      %22 = sbr.rel (0) target = $region9
    $region8: #{tpu_custom_call.1} parent=1 // pred_region
      %s24 = ssub.s32 64, 64
      %25 = vsyncadd [#allocation4], %s24
      %28 = dma.hbm_to_smem %s1, 64, [#allocation6], [#allocation4]
    $region9: #{tpu_custom_call.1} parent=1 // pred_fallthru
      _
    // Predicated region
    $region10: #{tpu_custom_call.1} parent=1 // pred_check
      _
    $region11: #{tpu_custom_call.1} parent=1 // pred_check_branch
      %30 = sbr.rel (0) target = $region13
    $region12: #{tpu_custom_call.1} parent=1 // pred_region
      %s32 = ssub.s32 16, 16
      %33 = vsyncadd [#allocation5], %s32
      %s35 = sshll.u32 %s2, 4
      %s36 = int_to_ptr.vmem [resolvable:$true] %s35
      %38 = dma.vmem_to_smem %s36, 16, [#allocation7], [#allocation5]
    $region13: #{tpu_custom_call.1} parent=1 // pred_fallthru
      _
    // Predicated region
    $region14: #{tpu_custom_call.1} parent=1 // pred_check
      _
    $region15: #{tpu_custom_call.1} parent=1 // pred_check_branch
      %40 = sbr.rel (0) target = $region17
    $region16: #{tpu_custom_call.1} parent=1 // pred_region
      %41 = dma.done [#allocation3], 512
    $region17: #{tpu_custom_call.1} parent=1 // pred_fallthru
      _
    // Predicated region
    $region18: #{tpu_custom_call.1} parent=1 // pred_check
      _
    $region19: #{tpu_custom_call.1} parent=1 // pred_check_branch
      %43 = sbr.rel (0) target = $region21
    $region20: #{tpu_custom_call.1} parent=1 // pred_region
      %44 = dma.done [#allocation4], 64
    $region21: #{tpu_custom_call.1} parent=1 // pred_fallthru
      _
    // Predicated region
    $region22: #{tpu_custom_call.1} parent=1 // pred_check
      _
    $region23: #{tpu_custom_call.1} parent=1 // pred_check_branch
      %46 = sbr.rel (0) target = $region25
    $region24: #{tpu_custom_call.1} parent=1 // pred_region
      %47 = dma.done [#allocation5], 16
    $region25: #{tpu_custom_call.1} parent=1 // pred_fallthru
      _
    %48 = sfence
    %s49 = smul.u32 0, 512
    %s50 = sshra.s32 %s49, 7
    %s51 = sand.u32 %s49, 127
    %s52 = smul.addr %s50, 8
    %s53 = scalar_lea.vmem [#allocation2], %s52
    %v54 = vld [vmem:[%s53] sm:$0xff]
    %v55 = vld [vmem:[%s53 + $0x8] sm:$0xff]
    %v56 = vld [vmem:[%s53 + $0x10] sm:$0xff]
    %v57 = vld [vmem:[%s53 + $0x18] sm:$0xff]
    %58 = vrot.lane.b32.xlu0 %v54, 1
    %v59 = vpop.permute.xlu0 %58
    %60 = vrot.lane.b32.xlu0 %v55, 1
    %v61 = vpop.permute.xlu0 %60
    %62 = vrot.lane.b32.xlu0 %v56, 1
    %v63 = vpop.permute.xlu0 %62
    %64 = vrot.lane.b32.xlu0 %v57, 1
    %v65 = vpop.permute.xlu0 %64
    %v66 = vlaneseq
    %v67 = vand.u32 %v66, 127
    %vm68 = vcmp.lt.s32.totalorder %v67, 1
    %v69 = vsel %vm68, %v63, %v65
    %v70 = vsel %vm68, %v61, %v63
    %v71 = vsel %vm68, %v59, %v61
    %v72 = vsel %vm68, %v65, %v59
    %73 = vrot.lane.b32.xlu0 %v54, 127
    %v74 = vpop.permute.xlu0 %73
    %75 = vrot.lane.b32.xlu0 %v55, 127
    %v76 = vpop.permute.xlu0 %75
    %77 = vrot.lane.b32.xlu0 %v56, 127
    %v78 = vpop.permute.xlu0 %77
    %79 = vrot.lane.b32.xlu0 %v57, 127
    %v80 = vpop.permute.xlu0 %79
    %vm81 = vcmp.lt.s32.totalorder %v67, 127
    %v82 = vsel %vm81, %v78, %v80
    %v83 = vsel %vm81, %v76, %v78
    %v84 = vsel %vm81, %v74, %v76
    %v85 = vsel %vm81, %v80, %v74
    %s86 = ssub.s32 %s49, 128
    %p87 = scmp.gt.s32.totalorder %s86, 0
    %s88 = scalar_select %p87, %s86, 0
    %s89 = sadd.s32 %s49, 512
    %p90 = scmp.lt.s32.totalorder %s89, 384
    %s91 = scalar_select %p90, %s89, 384
    %s92 = sshra.s32 %s88, 7
    %s93 = sand.u32 %s88, 127
    %s94 = smul.addr %s92, 8
    %s95 = scalar_lea.vmem [#allocation2], %s94
    %v96 = vld [vmem:[%s95] sm:$0xff]
    %s97 = sshra.s32 %s91, 7
    %s98 = sand.u32 %s91, 127
    %s99 = smul.addr %s97, 8
    %s100 = scalar_lea.vmem [#allocation2], %s99
    %v101 = vld [vmem:[%s100] sm:$0xff]
    %p102 = scmp.eq.s32.totalorder 0, 0
    %s103 = scalar_select %p102, 1, 0
    %v104 = vstv %s103
    %vm105 = vcmp.eq.s32.totalorder %v104, 1
    %v106 = vsel %vm105, 0.0, %v96
    %v107 = vsel %vm105, 0.0, %v101
    %s108 = sld [smem:[#allocation6]]
    %s109 = sld [smem:[#allocation6 + $0x1]]
    %s110 = sld [smem:[#allocation6 + $0x2]]
    %s111 = sld [smem:[#allocation7]]
    %v112 = vstv %s108
    %v113 = vmul.f32 %v112, %v72
    %v114 = vmul.f32 %v112, %v71
    %v115 = vmul.f32 %v112, %v70
    %v116 = vmul.f32 %v112, %v69
    %v117 = vstv %s109
    %v118 = vmul.f32 %v117, %v54
    %v119 = vmul.f32 %v117, %v55
    %v120 = vmul.f32 %v117, %v56
    %v121 = vmul.f32 %v117, %v57
    %v122 = vadd.f32 %v113, %v118
    %v123 = vadd.f32 %v114, %v119
    %v124 = vadd.f32 %v115, %v120
    %v125 = vadd.f32 %v116, %v121
    %v126 = vstv %s110
    %v127 = vmul.f32 %v126, %v84
    %v128 = vmul.f32 %v126, %v83
    %v129 = vmul.f32 %v126, %v82
    %v130 = vmul.f32 %v126, %v85
    %v131 = vadd.f32 %v122, %v127
    %v132 = vadd.f32 %v123, %v128
    %v133 = vadd.f32 %v124, %v129
    %v134 = vadd.f32 %v125, %v130
    %v135 = vstv %s111
    %v136 = vadd.f32 %v131, %v135
    %v137 = vadd.f32 %v132, %v135
    %v138 = vadd.f32 %v133, %v135
    %v139 = vadd.f32 %v134, %v135
    %v140 = vmul.f32 %v112, %v106
    %142 = vrot.lane.b32.xlu0 %v118, 127
    %v143 = vpop.permute.xlu0 %142
    %v145 = vadd.f32 %v140, %v143
    %v146 = vmul.f32 %v126, %v54
    %148 = vrot.lane.b32.xlu0 %v146, 126
    %v149 = vpop.permute.xlu0 %148
    %v151 = vadd.f32 %v145, %v149
    %v152 = vadd.f32 %v151, %v135
    %v153 = vmul.f32 %v112, %v57
    %155 = vrot.lane.b32.xlu0 %v121, 127
    %v156 = vpop.permute.xlu0 %155
    %v158 = vadd.f32 %v153, %v156
    %v159 = vmul.f32 %v126, %v107
    %161 = vrot.lane.b32.xlu0 %v159, 126
    %v162 = vpop.permute.xlu0 %161
    %v164 = vadd.f32 %v158, %v162
    %v165 = vadd.f32 %v164, %v135
    %166 = vst [vmem:[%s3] sm:$0xf] %v136
    %167 = vst [vmem:[%s3 + $0x8] sm:$0xf] %v137
    %168 = vst [vmem:[%s3 + $0x10] sm:$0xf] %v138
    %169 = vst [vmem:[%s3 + $0x18] sm:$0xf] %v139
    %171 = vrot.lane.b32.xlu0 %v152, 1
    %v172 = vpop.permute.xlu0 %171
    %vm174 = vcmask 3072
    %175 = vst.msk [vmem:[%s3] sm:$0xf] %vm174, %v172
    %177 = vrot.lane.b32.xlu0 %v165, 1
    %v178 = vpop.permute.xlu0 %177
    %vm180 = vcmask 1044472
    %181 = vst.msk [vmem:[%s3 + $0x18] sm:$0xf] %vm180, %v178
    %v186 = vrot.slane %v136, 4
    %v187 = vrot.slane %v137, 4
    %v188 = vrot.slane %v138, 4
    %v189 = vrot.slane %v139, 4
    %s194 = scalar_lea.vmem %s3, 64
    %195 = vst [vmem:[%s194] sm:$0xf] %v186
    %196 = vst [vmem:[%s194 + $0x8] sm:$0xf] %v187
    %197 = vst [vmem:[%s194 + $0x10] sm:$0xf] %v188
    %198 = vst [vmem:[%s194 + $0x18] sm:$0xf] %v189
    %v199 = vrot.slane %v152, 4
    %200 = vrot.lane.b32.xlu0 %v199, 1
    %v201 = vpop.permute.xlu0 %200
    %203 = vst.msk [vmem:[%s194] sm:$0xf] %vm174, %v201
    %v204 = vrot.slane %v165, 4
    %205 = vrot.lane.b32.xlu0 %v204, 1
    %v206 = vpop.permute.xlu0 %205
    %208 = vst.msk [vmem:[%s194 + $0x18] sm:$0xf] %vm180, %v206
    %s209 = sld [smem:[#allocation6 + $0x80]]
    %s210 = sld [smem:[#allocation6 + $0x81]]
    %s211 = sld [smem:[#allocation6 + $0x82]]
    %s212 = sld [smem:[#allocation7 + $0x1]]
    %v213 = vstv %s209
    %v214 = vmul.f32 %v213, %v72
    %v215 = vmul.f32 %v213, %v71
    %v216 = vmul.f32 %v213, %v70
    %v217 = vmul.f32 %v213, %v69
    %v218 = vstv %s210
    %v219 = vmul.f32 %v218, %v54
    %v220 = vmul.f32 %v218, %v55
    %v221 = vmul.f32 %v218, %v56
    %v222 = vmul.f32 %v218, %v57
    %v223 = vadd.f32 %v214, %v219
    %v224 = vadd.f32 %v215, %v220
    %v225 = vadd.f32 %v216, %v221
    %v226 = vadd.f32 %v217, %v222
    %v227 = vstv %s211
    %v228 = vmul.f32 %v227, %v84
    %v229 = vmul.f32 %v227, %v83
    %v230 = vmul.f32 %v227, %v82
    %v231 = vmul.f32 %v227, %v85
    %v232 = vadd.f32 %v223, %v228
    %v233 = vadd.f32 %v224, %v229
    %v234 = vadd.f32 %v225, %v230
    %v235 = vadd.f32 %v226, %v231
    %v236 = vstv %s212
    %v237 = vadd.f32 %v232, %v236
    %v238 = vadd.f32 %v233, %v236
    %v239 = vadd.f32 %v234, %v236
    %v240 = vadd.f32 %v235, %v236
    %v241 = vmul.f32 %v213, %v106
    %243 = vrot.lane.b32.xlu0 %v219, 127
    %v244 = vpop.permute.xlu0 %243
    %v246 = vadd.f32 %v241, %v244
    %v247 = vmul.f32 %v227, %v54
    %249 = vrot.lane.b32.xlu0 %v247, 126
    %v250 = vpop.permute.xlu0 %249
    %v252 = vadd.f32 %v246, %v250
    %v253 = vadd.f32 %v252, %v236
    %v254 = vmul.f32 %v213, %v57
    %256 = vrot.lane.b32.xlu0 %v222, 127
    %v257 = vpop.permute.xlu0 %256
    %v259 = vadd.f32 %v254, %v257
    %v260 = vmul.f32 %v227, %v107
    %262 = vrot.lane.b32.xlu0 %v260, 126
    %v263 = vpop.permute.xlu0 %262
    %v265 = vadd.f32 %v259, %v263
    %v266 = vadd.f32 %v265, %v236
    %v271 = vrot.slane %v237, 4
    %v272 = vrot.slane %v238, 4
    %v273 = vrot.slane %v239, 4
    %v274 = vrot.slane %v240, 4
    %279 = vst [vmem:[%s3] sm:$0xf0] %v271
    %280 = vst [vmem:[%s3 + $0x8] sm:$0xf0] %v272
    %281 = vst [vmem:[%s3 + $0x10] sm:$0xf0] %v273
    %282 = vst [vmem:[%s3 + $0x18] sm:$0xf0] %v274
    %v284 = vrot.slane %v253, 4
    %285 = vrot.lane.b32.xlu0 %v284, 1
    %v286 = vpop.permute.xlu0 %285
    %vm288 = vcmask 7172
    %289 = vst.msk [vmem:[%s3] sm:$0xf0] %vm288, %v286
    %v291 = vrot.slane %v266, 4
    %292 = vrot.lane.b32.xlu0 %v291, 1
    %v293 = vpop.permute.xlu0 %292
    %vm295 = vcmask 1048572
    %296 = vst.msk [vmem:[%s3 + $0x18] sm:$0xf0] %vm295, %v293
    %297 = vst [vmem:[%s194] sm:$0xf0] %v237
    %298 = vst [vmem:[%s194 + $0x8] sm:$0xf0] %v238
    %299 = vst [vmem:[%s194 + $0x10] sm:$0xf0] %v239
    %300 = vst [vmem:[%s194 + $0x18] sm:$0xf0] %v240
    %301 = vrot.lane.b32.xlu0 %v253, 1
    %v302 = vpop.permute.xlu0 %301
    %304 = vst.msk [vmem:[%s194] sm:$0xf0] %vm288, %v302
    %305 = vrot.lane.b32.xlu0 %v266, 1
    %v306 = vpop.permute.xlu0 %305
    %308 = vst.msk [vmem:[%s194 + $0x18] sm:$0xf0] %vm295, %v306
    %s309 = sld [smem:[#allocation6 + $0x100]]
    %s310 = sld [smem:[#allocation6 + $0x101]]
    %s311 = sld [smem:[#allocation6 + $0x102]]
    %s312 = sld [smem:[#allocation7 + $0x2]]
    %v313 = vstv %s309
    %v314 = vmul.f32 %v313, %v72
    %v315 = vmul.f32 %v313, %v71
    %v316 = vmul.f32 %v313, %v70
    %v317 = vmul.f32 %v313, %v69
    %v318 = vstv %s310
    %v319 = vmul.f32 %v318, %v54
    %v320 = vmul.f32 %v318, %v55
    %v321 = vmul.f32 %v318, %v56
    %v322 = vmul.f32 %v318, %v57
    %v323 = vadd.f32 %v314, %v319
    %v324 = vadd.f32 %v315, %v320
    %v325 = vadd.f32 %v316, %v321
    %v326 = vadd.f32 %v317, %v322
    %v327 = vstv %s311
    %v328 = vmul.f32 %v327, %v84
    %v329 = vmul.f32 %v327, %v83
    %v330 = vmul.f32 %v327, %v82
    %v331 = vmul.f32 %v327, %v85
    %v332 = vadd.f32 %v323, %v328
    %v333 = vadd.f32 %v324, %v329
    %v334 = vadd.f32 %v325, %v330
    %v335 = vadd.f32 %v326, %v331
    %v336 = vstv %s312
    %v337 = vadd.f32 %v332, %v336
    %v338 = vadd.f32 %v333, %v336
    %v339 = vadd.f32 %v334, %v336
    %v340 = vadd.f32 %v335, %v336
    %v341 = vmul.f32 %v313, %v106
    %343 = vrot.lane.b32.xlu0 %v319, 127
    %v344 = vpop.permute.xlu0 %343
    %v346 = vadd.f32 %v341, %v344
    %v347 = vmul.f32 %v327, %v54
    %349 = vrot.lane.b32.xlu0 %v347, 126
    %v350 = vpop.permute.xlu0 %349
    %v352 = vadd.f32 %v346, %v350
    %v353 = vadd.f32 %v352, %v336
    %v354 = vmul.f32 %v313, %v57
    %356 = vrot.lane.b32.xlu0 %v322, 127
    %v357 = vpop.permute.xlu0 %356
    %v359 = vadd.f32 %v354, %v357
    %v360 = vmul.f32 %v327, %v107
    %362 = vrot.lane.b32.xlu0 %v360, 126
    %v363 = vpop.permute.xlu0 %362
    %v365 = vadd.f32 %v359, %v363
    %v366 = vadd.f32 %v365, %v336
    %367 = vst [vmem:[%s3 + $0x20] sm:$0xf] %v337
    %368 = vst [vmem:[%s3 + $0x28] sm:$0xf] %v338
    %369 = vst [vmem:[%s3 + $0x30] sm:$0xf] %v339
    %370 = vst [vmem:[%s3 + $0x38] sm:$0xf] %v340
    %372 = vrot.lane.b32.xlu0 %v353, 1
    %v373 = vpop.permute.xlu0 %372
    %375 = vst.msk [vmem:[%s3 + $0x20] sm:$0xf] %vm174, %v373
    %377 = vrot.lane.b32.xlu0 %v366, 1
    %v378 = vpop.permute.xlu0 %377
    %380 = vst.msk [vmem:[%s3 + $0x38] sm:$0xf] %vm180, %v378
    %v385 = vrot.slane %v337, 4
    %v386 = vrot.slane %v338, 4
    %v387 = vrot.slane %v339, 4
    %v388 = vrot.slane %v340, 4
    %393 = vst [vmem:[%s194 + $0x20] sm:$0xf] %v385
    %394 = vst [vmem:[%s194 + $0x28] sm:$0xf] %v386
    %395 = vst [vmem:[%s194 + $0x30] sm:$0xf] %v387
    %396 = vst [vmem:[%s194 + $0x38] sm:$0xf] %v388
    %v397 = vrot.slane %v353, 4
    %398 = vrot.lane.b32.xlu0 %v397, 1
    %v399 = vpop.permute.xlu0 %398
    %401 = vst.msk [vmem:[%s194 + $0x20] sm:$0xf] %vm174, %v399
    %v402 = vrot.slane %v366, 4
    %403 = vrot.lane.b32.xlu0 %v402, 1
    %v404 = vpop.permute.xlu0 %403
    %406 = vst.msk [vmem:[%s194 + $0x38] sm:$0xf] %vm180, %v404
    // Predicated region
    $region26: #{tpu_custom_call.1} parent=1 // pred_check
      _
    $region27: #{tpu_custom_call.1} parent=1 // pred_check_branch
      %408 = sbr.rel (0) target = $region29
    $region28: #{tpu_custom_call.1} parent=1 // pred_region
      _
    $region29: #{tpu_custom_call.1} parent=1 // pred_fallthru
      _
    // Predicated region
    $region30: #{tpu_custom_call.1} parent=1 // pred_check
      _
    $region31: #{tpu_custom_call.1} parent=1 // pred_check_branch
      %410 = sbr.rel (0) target = $region33
    $region32: #{tpu_custom_call.1} parent=1 // pred_region
      _
    $region33: #{tpu_custom_call.1} parent=1 // pred_fallthru
      _
    %411 = vsyncpa [#allocation3], 1
    %412 = vsyncpa [#allocation4], 1
    %413 = vsyncpa [#allocation5], 1

// kernel: tpu_custom_call.1
$region0: #{tpu_custom_call.1}
  #allocation0 [shape = 'u32[]', space=smem, size = 0x4, offset = 0x4, fixed_abs, tag = 'smem constant byte address 0x4 - core index']
  #allocation1 [shape = 'u32[144,128]{1,0:T(1,128)}', space=vmem, size = 0x12000, scoped, tag = 'internal scratch']
  %s0 = inlined_call_operand.hbm [shape: f32[1,8,512], index: 0, kind: input, shape index: {}]
  %s1 = inlined_call_operand.hbm [shape: f32[3,3], index: 1, kind: input, shape index: {}]
  %s2 = inlined_call_operand.vmem [shape: f32[3], index: 2, kind: input, shape index: {}]
  %s3 = inlined_call_operand.vmem [shape: f32[1,2,12,512], index: 3, kind: output, shape index: {}]
  %s4 = sld [smem:[#allocation0]]
  $region34: #{tpu_custom_call.1} parent=0
    _
  %s6 = ssub.s32 1, %s4
  %s7 = scalar_select 0, %s6, %s4
  $region1: #{tpu_custom_call.1} parent=0
    #allocation2 [shape = 'u8[16384]{0}', space=vmem, size = 0x4000, scoped, tag = 'input window, operand 0, single buffered']
    #allocation3 [shape = 's32[1]{0}', space=sflag, size = 0x4, scoped, tag = 'scoped memory for tpu_custom_call.1']
    #allocation4 [shape = 's32[1]{0}', space=sflag, size = 0x4, scoped, tag = 'scoped memory for tpu_custom_call.1']
    #allocation5 [shape = 's32[1]{0}', space=sflag, size = 0x4, scoped, tag = 'scoped memory for tpu_custom_call.1']
    #allocation6 [shape = 'u8[2048]{0}', space=smem, size = 0x800, scoped, tag = 'input window, operand 1, single buffered']
    #allocation7 [shape = 'u8[512]{0}', space=smem, size = 0x200, scoped, tag = 'input window, operand 2, single buffered']
    %8 = vsyncpa [#allocation3], 0
    %9 = vsyncpa [#allocation4], 0
    %10 = vsyncpa [#allocation5], 0
    // Predicated region
    $region2: #{tpu_custom_call.1} parent=1 // pred_check
      _
    $region3: #{tpu_custom_call.1} parent=1 // pred_check_branch
      %12 = sbr.rel (0) target = $region5
    $region4: #{tpu_custom_call.1} parent=1 // pred_region
      %s14 = ssub.s32 512, 512
      %15 = vsyncadd [#allocation3], %s14
      %s17 = sshll.u32 [#allocation2], 4
      %s18 = int_to_ptr.vmem [resolvable:$true] %s17
      %20 = dma.hbm_to_vmem [thread:$0]  %s0, 512, %s18, [#allocation3]
    $region5: #{tpu_custom_call.1} parent=1 // pred_fallthru
      _
    // Predicated region
    $region6: #{tpu_custom_call.1} parent=1 // pred_check
      _
    $region7: #{tpu_custom_call.1} parent=1 // pred_check_branch
      %22 = sbr.rel (0) target = $region9
    $region8: #{tpu_custom_call.1} parent=1 // pred_region
      %s24 = ssub.s32 64, 64
      %25 = vsyncadd [#allocation4], %s24
      %28 = dma.hbm_to_smem %s1, 64, [#allocation6], [#allocation4]
    $region9: #{tpu_custom_call.1} parent=1 // pred_fallthru
      _
    // Predicated region
    $region10: #{tpu_custom_call.1} parent=1 // pred_check
      _
    $region11: #{tpu_custom_call.1} parent=1 // pred_check_branch
      %30 = sbr.rel (0) target = $region13
    $region12: #{tpu_custom_call.1} parent=1 // pred_region
      %s32 = ssub.s32 16, 16
      %33 = vsyncadd [#allocation5], %s32
      %s35 = sshll.u32 %s2, 4
      %s36 = int_to_ptr.vmem [resolvable:$true] %s35
      %38 = dma.vmem_to_smem %s36, 16, [#allocation7], [#allocation5]
    $region13: #{tpu_custom_call.1} parent=1 // pred_fallthru
      _
    // Predicated region
    $region14: #{tpu_custom_call.1} parent=1 // pred_check
      _
    $region15: #{tpu_custom_call.1} parent=1 // pred_check_branch
      %40 = sbr.rel (0) target = $region17
    $region16: #{tpu_custom_call.1} parent=1 // pred_region
      %41 = dma.done [#allocation3], 512
    $region17: #{tpu_custom_call.1} parent=1 // pred_fallthru
      _
    // Predicated region
    $region18: #{tpu_custom_call.1} parent=1 // pred_check
      _
    $region19: #{tpu_custom_call.1} parent=1 // pred_check_branch
      %43 = sbr.rel (0) target = $region21
    $region20: #{tpu_custom_call.1} parent=1 // pred_region
      %44 = dma.done [#allocation4], 64
    $region21: #{tpu_custom_call.1} parent=1 // pred_fallthru
      _
    // Predicated region
    $region22: #{tpu_custom_call.1} parent=1 // pred_check
      _
    $region23: #{tpu_custom_call.1} parent=1 // pred_check_branch
      %46 = sbr.rel (0) target = $region25
    $region24: #{tpu_custom_call.1} parent=1 // pred_region
      %47 = dma.done [#allocation5], 16
    $region25: #{tpu_custom_call.1} parent=1 // pred_fallthru
      _
    %48 = sfence
    %s49 = smul.u32 0, 512
    %s50 = sshra.s32 %s49, 7
    %s51 = sand.u32 %s49, 127
    %s52 = smul.addr %s50, 8
    %s53 = scalar_lea.vmem [#allocation2], %s52
    %v54 = vld [vmem:[%s53] sm:$0xff]
    %v55 = vld [vmem:[%s53 + $0x8] sm:$0xff]
    %v56 = vld [vmem:[%s53 + $0x10] sm:$0xff]
    %v57 = vld [vmem:[%s53 + $0x18] sm:$0xff]
    %58 = vrot.lane.b32.xlu0 %v54, 1
    %v59 = vpop.permute.xlu0 %58
    %60 = vrot.lane.b32.xlu0 %v55, 1
    %v61 = vpop.permute.xlu0 %60
    %62 = vrot.lane.b32.xlu0 %v56, 1
    %v63 = vpop.permute.xlu0 %62
    %64 = vrot.lane.b32.xlu0 %v57, 1
    %v65 = vpop.permute.xlu0 %64
    %v66 = vlaneseq
    %v67 = vand.u32 %v66, 127
    %vm68 = vcmp.lt.s32.totalorder %v67, 1
    %v69 = vsel %vm68, %v63, %v65
    %v70 = vsel %vm68, %v61, %v63
    %v71 = vsel %vm68, %v59, %v61
    %v72 = vsel %vm68, %v65, %v59
    %73 = vrot.lane.b32.xlu0 %v54, 127
    %v74 = vpop.permute.xlu0 %73
    %75 = vrot.lane.b32.xlu0 %v55, 127
    %v76 = vpop.permute.xlu0 %75
    %77 = vrot.lane.b32.xlu0 %v56, 127
    %v78 = vpop.permute.xlu0 %77
    %79 = vrot.lane.b32.xlu0 %v57, 127
    %v80 = vpop.permute.xlu0 %79
    %vm81 = vcmp.lt.s32.totalorder %v67, 127
    %v82 = vsel %vm81, %v78, %v80
    %v83 = vsel %vm81, %v76, %v78
    %v84 = vsel %vm81, %v74, %v76
    %v85 = vsel %vm81, %v80, %v74
    %s86 = ssub.s32 %s49, 128
    %p87 = scmp.gt.s32.totalorder %s86, 0
    %s88 = scalar_select %p87, %s86, 0
    %s89 = sadd.s32 %s49, 512
    %p90 = scmp.lt.s32.totalorder %s89, 384
    %s91 = scalar_select %p90, %s89, 384
    %s92 = sshra.s32 %s88, 7
    %s93 = sand.u32 %s88, 127
    %s94 = smul.addr %s92, 8
    %s95 = scalar_lea.vmem [#allocation2], %s94
    %v96 = vld [vmem:[%s95] sm:$0xff]
    %s97 = sshra.s32 %s91, 7
    %s98 = sand.u32 %s91, 127
    %s99 = smul.addr %s97, 8
    %s100 = scalar_lea.vmem [#allocation2], %s99
    %v101 = vld [vmem:[%s100] sm:$0xff]
    %p102 = scmp.eq.s32.totalorder 0, 0
    %s103 = scalar_select %p102, 1, 0
    %v104 = vstv %s103
    %vm105 = vcmp.eq.s32.totalorder %v104, 1
    %v106 = vsel %vm105, 0.0, %v96
    %v107 = vsel %vm105, 0.0, %v101
    %s108 = sld [smem:[#allocation6]]
    %s109 = sld [smem:[#allocation6 + $0x1]]
    %s110 = sld [smem:[#allocation6 + $0x2]]
    %s111 = sld [smem:[#allocation7]]
    %v112 = vstv %s108
    %v113 = vmul.f32 %v112, %v72
    %v114 = vmul.f32 %v112, %v71
    %v115 = vmul.f32 %v112, %v70
    %v116 = vmul.f32 %v112, %v69
    %v117 = vstv %s109
    %v118 = vmul.f32 %v117, %v54
    %v119 = vmul.f32 %v117, %v55
    %v120 = vmul.f32 %v117, %v56
    %v121 = vmul.f32 %v117, %v57
    %v122 = vadd.f32 %v113, %v118
    %v123 = vadd.f32 %v114, %v119
    %v124 = vadd.f32 %v115, %v120
    %v125 = vadd.f32 %v116, %v121
    %v126 = vstv %s110
    %v127 = vmul.f32 %v126, %v84
    %v128 = vmul.f32 %v126, %v83
    %v129 = vmul.f32 %v126, %v82
    %v130 = vmul.f32 %v126, %v85
    %v131 = vadd.f32 %v122, %v127
    %v132 = vadd.f32 %v123, %v128
    %v133 = vadd.f32 %v124, %v129
    %v134 = vadd.f32 %v125, %v130
    %v135 = vstv %s111
    %v136 = vadd.f32 %v131, %v135
    %v137 = vadd.f32 %v132, %v135
    %v138 = vadd.f32 %v133, %v135
    %v139 = vadd.f32 %v134, %v135
    %v140 = vmul.f32 %v112, %v106
    %142 = vrot.lane.b32.xlu0 %v118, 127
    %v143 = vpop.permute.xlu0 %142
    %v145 = vadd.f32 %v140, %v143
    %v146 = vmul.f32 %v126, %v54
    %148 = vrot.lane.b32.xlu0 %v146, 126
    %v149 = vpop.permute.xlu0 %148
    %v151 = vadd.f32 %v145, %v149
    %v152 = vadd.f32 %v151, %v135
    %v153 = vmul.f32 %v112, %v57
    %155 = vrot.lane.b32.xlu0 %v121, 127
    %v156 = vpop.permute.xlu0 %155
    %v158 = vadd.f32 %v153, %v156
    %v159 = vmul.f32 %v126, %v107
    %161 = vrot.lane.b32.xlu0 %v159, 126
    %v162 = vpop.permute.xlu0 %161
    %v164 = vadd.f32 %v158, %v162
    %v165 = vadd.f32 %v164, %v135
    %166 = vst [vmem:[%s3] sm:$0xf] %v136
    %167 = vst [vmem:[%s3 + $0x8] sm:$0xf] %v137
    %168 = vst [vmem:[%s3 + $0x10] sm:$0xf] %v138
    %169 = vst [vmem:[%s3 + $0x18] sm:$0xf] %v139
    %171 = vrot.lane.b32.xlu0 %v152, 1
    %v172 = vpop.permute.xlu0 %171
    %vm174 = vcmask 3072
    %175 = vst.msk [vmem:[%s3] sm:$0xf] %vm174, %v172
    %177 = vrot.lane.b32.xlu0 %v165, 1
    %v178 = vpop.permute.xlu0 %177
    %vm180 = vcmask 1044472
    %181 = vst.msk [vmem:[%s3 + $0x18] sm:$0xf] %vm180, %v178
    %v186 = vrot.slane %v136, 4
    %v187 = vrot.slane %v137, 4
    %v188 = vrot.slane %v138, 4
    %v189 = vrot.slane %v139, 4
    %s194 = scalar_lea.vmem %s3, 64
    %195 = vst [vmem:[%s194] sm:$0xf] %v186
    %196 = vst [vmem:[%s194 + $0x8] sm:$0xf] %v187
    %197 = vst [vmem:[%s194 + $0x10] sm:$0xf] %v188
    %198 = vst [vmem:[%s194 + $0x18] sm:$0xf] %v189
    %v199 = vrot.slane %v152, 4
    %200 = vrot.lane.b32.xlu0 %v199, 1
    %v201 = vpop.permute.xlu0 %200
    %203 = vst.msk [vmem:[%s194] sm:$0xf] %vm174, %v201
    %v204 = vrot.slane %v165, 4
    %205 = vrot.lane.b32.xlu0 %v204, 1
    %v206 = vpop.permute.xlu0 %205
    %208 = vst.msk [vmem:[%s194 + $0x18] sm:$0xf] %vm180, %v206
    %s209 = sld [smem:[#allocation6 + $0x80]]
    %s210 = sld [smem:[#allocation6 + $0x81]]
    %s211 = sld [smem:[#allocation6 + $0x82]]
    %s212 = sld [smem:[#allocation7 + $0x1]]
    %v213 = vstv %s209
    %v214 = vmul.f32 %v213, %v72
    %v215 = vmul.f32 %v213, %v71
    %v216 = vmul.f32 %v213, %v70
    %v217 = vmul.f32 %v213, %v69
    %v218 = vstv %s210
    %v219 = vmul.f32 %v218, %v54
    %v220 = vmul.f32 %v218, %v55
    %v221 = vmul.f32 %v218, %v56
    %v222 = vmul.f32 %v218, %v57
    %v223 = vadd.f32 %v214, %v219
    %v224 = vadd.f32 %v215, %v220
    %v225 = vadd.f32 %v216, %v221
    %v226 = vadd.f32 %v217, %v222
    %v227 = vstv %s211
    %v228 = vmul.f32 %v227, %v84
    %v229 = vmul.f32 %v227, %v83
    %v230 = vmul.f32 %v227, %v82
    %v231 = vmul.f32 %v227, %v85
    %v232 = vadd.f32 %v223, %v228
    %v233 = vadd.f32 %v224, %v229
    %v234 = vadd.f32 %v225, %v230
    %v235 = vadd.f32 %v226, %v231
    %v236 = vstv %s212
    %v237 = vadd.f32 %v232, %v236
    %v238 = vadd.f32 %v233, %v236
    %v239 = vadd.f32 %v234, %v236
    %v240 = vadd.f32 %v235, %v236
    %v241 = vmul.f32 %v213, %v106
    %243 = vrot.lane.b32.xlu0 %v219, 127
    %v244 = vpop.permute.xlu0 %243
    %v246 = vadd.f32 %v241, %v244
    %v247 = vmul.f32 %v227, %v54
    %249 = vrot.lane.b32.xlu0 %v247, 126
    %v250 = vpop.permute.xlu0 %249
    %v252 = vadd.f32 %v246, %v250
    %v253 = vadd.f32 %v252, %v236
    %v254 = vmul.f32 %v213, %v57
    %256 = vrot.lane.b32.xlu0 %v222, 127
    %v257 = vpop.permute.xlu0 %256
    %v259 = vadd.f32 %v254, %v257
    %v260 = vmul.f32 %v227, %v107
    %262 = vrot.lane.b32.xlu0 %v260, 126
    %v263 = vpop.permute.xlu0 %262
    %v265 = vadd.f32 %v259, %v263
    %v266 = vadd.f32 %v265, %v236
    %v271 = vrot.slane %v237, 4
    %v272 = vrot.slane %v238, 4
    %v273 = vrot.slane %v239, 4
    %v274 = vrot.slane %v240, 4
    %279 = vst [vmem:[%s3] sm:$0xf0] %v271
    %280 = vst [vmem:[%s3 + $0x8] sm:$0xf0] %v272
    %281 = vst [vmem:[%s3 + $0x10] sm:$0xf0] %v273
    %282 = vst [vmem:[%s3 + $0x18] sm:$0xf0] %v274
    %v284 = vrot.slane %v253, 4
    %285 = vrot.lane.b32.xlu0 %v284, 1
    %v286 = vpop.permute.xlu0 %285
    %vm288 = vcmask 7172
    %289 = vst.msk [vmem:[%s3] sm:$0xf0] %vm288, %v286
    %v291 = vrot.slane %v266, 4
    %292 = vrot.lane.b32.xlu0 %v291, 1
    %v293 = vpop.permute.xlu0 %292
    %vm295 = vcmask 1048572
    %296 = vst.msk [vmem:[%s3 + $0x18] sm:$0xf0] %vm295, %v293
    %297 = vst [vmem:[%s194] sm:$0xf0] %v237
    %298 = vst [vmem:[%s194 + $0x8] sm:$0xf0] %v238
    %299 = vst [vmem:[%s194 + $0x10] sm:$0xf0] %v239
    %300 = vst [vmem:[%s194 + $0x18] sm:$0xf0] %v240
    %301 = vrot.lane.b32.xlu0 %v253, 1
    %v302 = vpop.permute.xlu0 %301
    %304 = vst.msk [vmem:[%s194] sm:$0xf0] %vm288, %v302
    %305 = vrot.lane.b32.xlu0 %v266, 1
    %v306 = vpop.permute.xlu0 %305
    %308 = vst.msk [vmem:[%s194 + $0x18] sm:$0xf0] %vm295, %v306
    %s309 = sld [smem:[#allocation6 + $0x100]]
    %s310 = sld [smem:[#allocation6 + $0x101]]
    %s311 = sld [smem:[#allocation6 + $0x102]]
    %s312 = sld [smem:[#allocation7 + $0x2]]
    %v313 = vstv %s309
    %v314 = vmul.f32 %v313, %v72
    %v315 = vmul.f32 %v313, %v71
    %v316 = vmul.f32 %v313, %v70
    %v317 = vmul.f32 %v313, %v69
    %v318 = vstv %s310
    %v319 = vmul.f32 %v318, %v54
    %v320 = vmul.f32 %v318, %v55
    %v321 = vmul.f32 %v318, %v56
    %v322 = vmul.f32 %v318, %v57
    %v323 = vadd.f32 %v314, %v319
    %v324 = vadd.f32 %v315, %v320
    %v325 = vadd.f32 %v316, %v321
    %v326 = vadd.f32 %v317, %v322
    %v327 = vstv %s311
    %v328 = vmul.f32 %v327, %v84
    %v329 = vmul.f32 %v327, %v83
    %v330 = vmul.f32 %v327, %v82
    %v331 = vmul.f32 %v327, %v85
    %v332 = vadd.f32 %v323, %v328
    %v333 = vadd.f32 %v324, %v329
    %v334 = vadd.f32 %v325, %v330
    %v335 = vadd.f32 %v326, %v331
    %v336 = vstv %s312
    %v337 = vadd.f32 %v332, %v336
    %v338 = vadd.f32 %v333, %v336
    %v339 = vadd.f32 %v334, %v336
    %v340 = vadd.f32 %v335, %v336
    %v341 = vmul.f32 %v313, %v106
    %343 = vrot.lane.b32.xlu0 %v319, 127
    %v344 = vpop.permute.xlu0 %343
    %v346 = vadd.f32 %v341, %v344
    %v347 = vmul.f32 %v327, %v54
    %349 = vrot.lane.b32.xlu0 %v347, 126
    %v350 = vpop.permute.xlu0 %349
    %v352 = vadd.f32 %v346, %v350
    %v353 = vadd.f32 %v352, %v336
    %v354 = vmul.f32 %v313, %v57
    %356 = vrot.lane.b32.xlu0 %v322, 127
    %v357 = vpop.permute.xlu0 %356
    %v359 = vadd.f32 %v354, %v357
    %v360 = vmul.f32 %v327, %v107
    %362 = vrot.lane.b32.xlu0 %v360, 126
    %v363 = vpop.permute.xlu0 %362
    %v365 = vadd.f32 %v359, %v363
    %v366 = vadd.f32 %v365, %v336
    %367 = vst [vmem:[%s3 + $0x20] sm:$0xf] %v337
    %368 = vst [vmem:[%s3 + $0x28] sm:$0xf] %v338
    %369 = vst [vmem:[%s3 + $0x30] sm:$0xf] %v339
    %370 = vst [vmem:[%s3 + $0x38] sm:$0xf] %v340
    %372 = vrot.lane.b32.xlu0 %v353, 1
    %v373 = vpop.permute.xlu0 %372
    %375 = vst.msk [vmem:[%s3 + $0x20] sm:$0xf] %vm174, %v373
    %377 = vrot.lane.b32.xlu0 %v366, 1
    %v378 = vpop.permute.xlu0 %377
    %380 = vst.msk [vmem:[%s3 + $0x38] sm:$0xf] %vm180, %v378
    %v385 = vrot.slane %v337, 4
    %v386 = vrot.slane %v338, 4
    %v387 = vrot.slane %v339, 4
    %v388 = vrot.slane %v340, 4
    %393 = vst [vmem:[%s194 + $0x20] sm:$0xf] %v385
    %394 = vst [vmem:[%s194 + $0x28] sm:$0xf] %v386
    %395 = vst [vmem:[%s194 + $0x30] sm:$0xf] %v387
    %396 = vst [vmem:[%s194 + $0x38] sm:$0xf] %v388
    %v397 = vrot.slane %v353, 4
    %398 = vrot.lane.b32.xlu0 %v397, 1
    %v399 = vpop.permute.xlu0 %398
    %401 = vst.msk [vmem:[%s194 + $0x20] sm:$0xf] %vm174, %v399
    %v402 = vrot.slane %v366, 4
    %403 = vrot.lane.b32.xlu0 %v402, 1
    %v404 = vpop.permute.xlu0 %403
    %406 = vst.msk [vmem:[%s194 + $0x38] sm:$0xf] %vm180, %v404
    // Predicated region
    $region26: #{tpu_custom_call.1} parent=1 // pred_check
      _
    $region27: #{tpu_custom_call.1} parent=1 // pred_check_branch
      %408 = sbr.rel (0) target = $region29
    $region28: #{tpu_custom_call.1} parent=1 // pred_region
      _
    $region29: #{tpu_custom_call.1} parent=1 // pred_fallthru
      _
    // Predicated region
    $region30: #{tpu_custom_call.1} parent=1 // pred_check
      _
    $region31: #{tpu_custom_call.1} parent=1 // pred_check_branch
      %410 = sbr.rel (0) target = $region33
    $region32: #{tpu_custom_call.1} parent=1 // pred_region
      _
    $region33: #{tpu_custom_call.1} parent=1 // pred_fallthru
      _
    %411 = vsyncpa [#allocation3], 1
    %412 = vsyncpa [#allocation4], 1
    %413 = vsyncpa [#allocation5], 1

</llo_original>
